<compile_context>
chip_gen: v5e
topology: v5e:2x2
jax: 0.10.0
libtpu: 0.0.40
codegen_flags: <defaults>
</compile_context>

<pallas_src>
import functools

import jax
import jax.numpy as jnp
import numpy as np
from jax import lax
from jax.experimental import pallas as pl
from jax.experimental.pallas import tpu as pltpu


def _round_up(x, m):
    return (x + m - 1) // m * m


def _vmem_capacity_bytes():
    try:
        return int(pltpu.get_tpu_info().vmem_capacity_bytes)
    except Exception:
        return 64 << 20  # conservative (v7x-sized) fallback


def _lstm_chunk_kernel(x_ref, wi_ref, wh_ref, b_ref, h_ref, c_ref,
                       gi_ref, gf_ref, gg_ref, go_ref,
                       *, n_h, t_chunk, t_total, unroll):
    """One grid step = t_chunk timesteps of the LSTM recurrence for one row block.

    x_ref : [Tc, Mb, n_in]   raw input chunk (time-major)
    wi_ref: [4, n_in, n_h]   per-gate input->gate weights (VMEM resident)
    wh_ref: [4, n_h, n_h]    per-gate hidden->gate weights (VMEM resident)
    b_ref : [4, 1, n_h]      per-gate fused biases (VMEM resident)
    h_ref : [Mb, n_h]        output ref; doubles as resident hidden state
    c_ref : [Mb, n_h]        VMEM scratch cell state
    g*_ref: [Tc, Mb, n_h]    VMEM scratch per-gate input pre-activations (i|f|g|o)
    """
    t_blk = pl.program_id(1)

    @pl.when(t_blk == 0)
    def _init():
        h_ref[...] = jnp.zeros_like(h_ref)
        c_ref[...] = jnp.zeros_like(c_ref)

    tc, mb, n_in = x_ref.shape

    # Fused input projection for the whole chunk: batched MXU matmuls
    # ([Tc*Mb, n_in] x [n_in, n_h]) with the bias folded in, written once to
    # VMEM scratch. Replaces the HBM-materialized G tensor of v1.
    x2 = x_ref[...].reshape(tc * mb, n_in)
    for k, gref in enumerate((gi_ref, gf_ref, gg_ref, go_ref)):
        proj = jnp.dot(x2, wi_ref[k], preferred_element_type=jnp.float32)
        gref[...] = (proj + b_ref[k]).reshape(tc, mb, n_h)

    wh = wh_ref[...]                              # hoisted; reused every timestep
    needs_mask = (t_total % t_chunk) != 0         # static: only last chunk ragged

    def sigmoid1(x):
        # logistic via a single tanh -> exactly one EUP op per gate element
        return 0.5 * jnp.tanh(0.5 * x) + 0.5

    def step(j, carry):
        h, c = carry
        # Recurrent gate pre-activations: four small aligned MXU matmuls.
        i_t = sigmoid1(gi_ref[j] + jnp.dot(h, wh[0], preferred_element_type=jnp.float32))
        f_t = sigmoid1(gf_ref[j] + jnp.dot(h, wh[1], preferred_element_type=jnp.float32))
        g_t = jnp.tanh(gg_ref[j] + jnp.dot(h, wh[2], preferred_element_type=jnp.float32))
        o_t = sigmoid1(go_ref[j] + jnp.dot(h, wh[3], preferred_element_type=jnp.float32))
        c_new = f_t * c + i_t * g_t
        h_new = o_t * jnp.tanh(c_new)
        if needs_mask:
            valid = (t_blk * t_chunk + j) < t_total
            h_new = jnp.where(valid, h_new, h)
            c_new = jnp.where(valid, c_new, c)
        return h_new, c_new

    h_fin, c_fin = lax.fori_loop(0, t_chunk, step, (h_ref[...], c_ref[...]),
                                 unroll=unroll)
    h_ref[...] = h_fin
    c_ref[...] = c_fin


@jax.jit
def rnn_lstm_pallas(X, Wi, Wh, b):
    """X: [B, A, T, n_in] -> last hidden state [B, A, n_h] (return_sequence=False).

    Wi: [n_in, 4*n_h], Wh: [n_h, 4*n_h], b: [1, 4*n_h] fused gate params in
    i|f|g|o order (PyTorch nn.Linear weights pre-transposed / pre-fused).
    """
    B, A, T, n_in = X.shape
    n_h = Wh.shape[0]
    M = B * A

    # Gate index moved to a leading dim: no per-gate lane padding (avoids the
    # (128/n_h)^2 MAC blowup for small n_h) and no unaligned lane slicing.
    Wi_g = Wi.reshape(n_in, 4, n_h).transpose(1, 0, 2).astype(jnp.float32)  # [4, n_in, n_h]
    Wh_g = Wh.reshape(n_h, 4, n_h).transpose(1, 0, 2).astype(jnp.float32)   # [4, n_h,  n_h]
    b_g = b.reshape(1, 4, n_h).transpose(1, 0, 2).astype(jnp.float32)       # [4, 1,    n_h]

    # Lane-padded widths used only for VMEM/vreg byte estimates.
    n_h_l = _round_up(n_h, 128)
    n_in_l = _round_up(n_in, 128)

    # Row-block size: multiple of 8, sized so the register-carried h/c plus the
    # per-step gate temporaries (~8 arrays of [Mb, n_h] f32) stay within about
    # half of the 64 x 4 KiB vreg file (no spill -> ld/st slots stay free).
    mb_cap = max(8, ((128 * 1024) // (8 * n_h_l * 4)) // 8 * 8)
    Mb = int(max(8, min(_round_up(M, 8), mb_cap, 256)))
    Mp = _round_up(M, Mb)

    # Timesteps per grid step: amortize the ~0.35us/step pipeline overhead.
    # VMEM per timestep: 4 per-gate scratch rows + double-buffered X chunk rows.
    vmem_cap = _vmem_capacity_bytes()
    chunk_budget = (8 << 20) if vmem_cap <= (64 << 20) else (24 << 20)
    bytes_per_t = 4 * Mb * n_h_l * 4 + 2 * Mb * n_in_l * 4
    Tc = int(max(1, min(T, 512, chunk_budget // max(bytes_per_t, 1))))
    Tp = _round_up(T, Tc)

    # Time-major input so per-timestep access in the kernel is a cheap
    # leading-dim index. X itself is small; no G tensor is materialized.
    Xr = jnp.transpose(X.reshape(M, T, n_in), (1, 0, 2)).astype(jnp.float32)
    if Tp != T or Mp != M:
        Xr = jnp.pad(Xr, ((0, Tp - T), (0, Mp - M), (0, 0)))

    # Explicit VMEM budget (instead of inheriting the scoped default).
    vmem_needed = (
        2 * Tc * Mb * n_in_l * 4                                    # X chunks (x2 buffers)
        + 4 * Tc * Mb * n_h_l * 4                                   # per-gate scratch
        + 2 * 4 * (_round_up(n_in, 8) + _round_up(n_h, 8) + 8) * n_h_l * 4  # Wi/Wh/b (x2)
        + 3 * Mb * n_h_l * 4                                        # h out (x2) + c scratch
    )
    vmem_limit = int(min(max(int(1.5 * vmem_needed), 16 << 20),
                         int(0.75 * vmem_cap)))

    kernel = functools.partial(_lstm_chunk_kernel, n_h=n_h, t_chunk=Tc,
                               t_total=T, unroll=min(8, Tc))

    out = pl.pallas_call(
        kernel,
        out_shape=jax.ShapeDtypeStruct((Mp, n_h), jnp.float32),
        grid_spec=pltpu.PrefetchScalarGridSpec(
            num_scalar_prefetch=0,
            grid=(Mp // Mb, Tp // Tc),                               # (row blocks, time chunks)
            in_specs=[
                pl.BlockSpec((Tc, Mb, n_in), lambda r, t: (t, r, 0)),   # X chunk
                pl.BlockSpec((4, n_in, n_h), lambda r, t: (0, 0, 0)),   # Wi resident
                pl.BlockSpec((4, n_h, n_h), lambda r, t: (0, 0, 0)),    # Wh resident
                pl.BlockSpec((4, 1, n_h), lambda r, t: (0, 0, 0)),      # bias resident
            ],
            out_specs=pl.BlockSpec((Mb, n_h), lambda r, t: (r, 0)),     # h resident over t
            scratch_shapes=[
                pltpu.VMEM((Mb, n_h), jnp.float32),        # c state
                pltpu.VMEM((Tc, Mb, n_h), jnp.float32),    # i-gate x-projection
                pltpu.VMEM((Tc, Mb, n_h), jnp.float32),    # f-gate x-projection
                pltpu.VMEM((Tc, Mb, n_h), jnp.float32),    # g-gate x-projection
                pltpu.VMEM((Tc, Mb, n_h), jnp.float32),    # o-gate x-projection
            ],
        ),
        compiler_params=pltpu.CompilerParams(
            dimension_semantics=("parallel", "arbitrary"),   # rows parallel, time serial
            vmem_limit_bytes=vmem_limit,
        ),
    )(Xr, Wi_g, Wh_g, b_g)

    return out[:M, :].reshape(B, A, n_h)


def init_lstm_params(key, n_in, n_h):
    """Deterministic init of the 8 nn.Linear layers of LSTMCell, then fuse.

    PyTorch Linear: y = x @ W.T + b with W:[n_h, fan_in]. We store the
    transposed, gate-fused matrices directly (gate order i|f|g|o).
    """
    keys = jax.random.split(key, 16)
    scale = 0.2

    def lin(kw, kb, fan_in):
        W = scale * jax.random.normal(kw, (n_h, fan_in), jnp.float32)
        bvec = scale * jax.random.normal(kb, (n_h,), jnp.float32)
        return W, bvec

    W_ii, b_ii = lin(keys[0], keys[1], n_in)
    W_hi, b_hi = lin(keys[2], keys[3], n_h)
    W_if, b_if = lin(keys[4], keys[5], n_in)
    W_hf, b_hf = lin(keys[6], keys[7], n_h)
    W_ig, b_ig = lin(keys[8], keys[9], n_in)
    W_hg, b_hg = lin(keys[10], keys[11], n_h)
    W_io, b_io = lin(keys[12], keys[13], n_in)
    W_ho, b_ho = lin(keys[14], keys[15], n_h)

    Wi = jnp.concatenate([W_ii.T, W_if.T, W_ig.T, W_io.T], axis=1)  # [n_in, 4*n_h]
    Wh = jnp.concatenate([W_hi.T, W_hf.T, W_hg.T, W_ho.T], axis=1)  # [n_h, 4*n_h]
    b = jnp.concatenate(
        [b_ii + b_hi, b_if + b_hf, b_ig + b_hg, b_io + b_ho]
    ).reshape(1, 4 * n_h)
    return Wi, Wh, b


def rnn_lstm_reference(X, Wi, Wh, b):
    """Pure-JAX reference mirroring the PyTorch RNN(LSTMCell) loop."""
    B, A, T, n_in = X.shape
    n_h = Wh.shape[0]
    h = jnp.zeros((B, A, n_h), jnp.float32)
    c = jnp.zeros((B, A, n_h), jnp.float32)
    for t in range(T):
        x_t = X[:, :, t, :]
        gates = x_t @ Wi + h @ Wh + b[0]
        i_t = jax.nn.sigmoid(gates[..., 0 * n_h:1 * n_h])
        f_t = jax.nn.sigmoid(gates[..., 1 * n_h:2 * n_h])
        g_t = jnp.tanh(gates[..., 2 * n_h:3 * n_h])
        o_t = jax.nn.sigmoid(gates[..., 3 * n_h:4 * n_h])
        c = f_t * c + i_t * g_t
        h = o_t * jnp.tanh(c)
    return h  # return_sequence=False -> last hidden state


if __name__ == "__main__":
    B, A, T, n_in, n_h = 2, 4, 8, 16, 32

    key = jax.random.PRNGKey(0)
    k_x, k_p = jax.random.split(key)
    X = jax.random.normal(k_x, (B, A, T, n_in), jnp.float32)
    Wi, Wh, b = init_lstm_params(k_p, n_in, n_h)

    out = rnn_lstm_pallas(X, Wi, Wh, b)
    out = jax.block_until_ready(out)

    ref = rnn_lstm_reference(X, Wi, Wh, b)
    np.testing.assert_allclose(np.asarray(out), np.asarray(ref), rtol=1e-4, atol=1e-4)

    print("KERNEL_OK")
</pallas_src>

<mosaic_0001>
module attributes {stable_mosaic.version = 11 : i64} {
  func.func @_lstm_chunk_kernel(%arg0: i32, %arg1: i32, %arg2: memref<8x8x16xf32, #tpu.memory_space<vmem>>, %arg3: memref<4x16x32xf32, #tpu.memory_space<vmem>>, %arg4: memref<4x32x32xf32, #tpu.memory_space<vmem>>, %arg5: memref<4x1x32xf32, #tpu.memory_space<vmem>>, %arg6: memref<8x32xf32, #tpu.memory_space<vmem>>, %arg7: memref<8x32xf32, #tpu.memory_space<vmem>>, %arg8: memref<8x8x32xf32, #tpu.memory_space<vmem>>, %arg9: memref<8x8x32xf32, #tpu.memory_space<vmem>>, %arg10: memref<8x8x32xf32, #tpu.memory_space<vmem>>, %arg11: memref<8x8x32xf32, #tpu.memory_space<vmem>>) attributes {dimension_semantics = [#tpu.dimension_semantics<parallel>, #tpu.dimension_semantics<arbitrary>], iteration_bounds = array<i64: 1, 1>, scalar_prefetch = 0 : i64, scratch_operands = 5 : i64, tpu.core_type = #tpu.core_type<tc>, window_params = [{transform_indices = @transform_0, window_bounds = array<i64: 8, 8, 16>}, {pipeline_mode = #tpu.pipeline_mode<synchronous>, transform_indices = @transform_1, window_bounds = array<i64: 4, 16, 32>}, {pipeline_mode = #tpu.pipeline_mode<synchronous>, transform_indices = @transform_2, window_bounds = array<i64: 4, 32, 32>}, {pipeline_mode = #tpu.pipeline_mode<synchronous>, transform_indices = @transform_3, window_bounds = array<i64: 4, 1, 32>}, {transform_indices = @transform_4, window_bounds = array<i64: 8, 32>}]} {
    %c0_i32 = arith.constant 0 : i32
    %0 = arith.cmpi eq, %arg1, %c0_i32 : i32
    %1 = arith.extui %0 : i1 to i32
    %c0_i32_0 = arith.constant 0 : i32
    %2 = arith.cmpi ne, %1, %c0_i32_0 : i32
    scf.if %2 {
      %cst_219 = arith.constant 0.000000e+00 : f32
      %486 = vector.broadcast %cst_219 : f32 to vector<8x32xf32>
      %c0_220 = arith.constant 0 : index
      %c0_221 = arith.constant 0 : index
      %487 = vector.load %arg6[%c0_220, %c0_221] : memref<8x32xf32, #tpu.memory_space<vmem>>, vector<8x32xf32>
      tpu.vector_store %arg6[%c0_220, %c0_221], %486 {strides = array<i32>} : memref<8x32xf32, #tpu.memory_space<vmem>>, vector<8x32xf32>,
      %cst_222 = arith.constant 0.000000e+00 : f32
      %488 = vector.broadcast %cst_222 : f32 to vector<8x32xf32>
      %c0_223 = arith.constant 0 : index
      %c0_224 = arith.constant 0 : index
      %489 = vector.load %arg7[%c0_223, %c0_224] : memref<8x32xf32, #tpu.memory_space<vmem>>, vector<8x32xf32>
      tpu.vector_store %arg7[%c0_223, %c0_224], %488 {strides = array<i32>} : memref<8x32xf32, #tpu.memory_space<vmem>>, vector<8x32xf32>,
    } else {
    }
    %c0 = arith.constant 0 : index
    %c0_1 = arith.constant 0 : index
    %c0_2 = arith.constant 0 : index
    %3 = vector.load %arg2[%c0, %c0_1, %c0_2] : memref<8x8x16xf32, #tpu.memory_space<vmem>>, vector<8x8x16xf32>
    %4 = vector.shape_cast %3 : vector<8x8x16xf32> to vector<64x16xf32>
    %c0_3 = arith.constant 0 : index
    %c0_4 = arith.constant 0 : index
    %c0_5 = arith.constant 0 : index
    %5 = vector.load %arg3[%c0_3, %c0_4, %c0_5] : memref<4x16x32xf32, #tpu.memory_space<vmem>>, vector<1x16x32xf32>
    %6 = vector.shape_cast %5 : vector<1x16x32xf32> to vector<16x32xf32>
    %cst = arith.constant dense<0.000000e+00> : vector<64x32xf32>
    %7 = tpu.matmul %4, %6, %cst {dimension_numbers = #tpu.dot_dimension_numbers<[1], [0], [0], [1], [0, 0, 1, 1], [], []>} : vector<64x16xf32>, vector<16x32xf32>, vector<64x32xf32> -> vector<64x32xf32>
    %c0_6 = arith.constant 0 : index
    %c0_7 = arith.constant 0 : index
    %c0_8 = arith.constant 0 : index
    %8 = vector.load %arg5[%c0_6, %c0_7, %c0_8] : memref<4x1x32xf32, #tpu.memory_space<vmem>>, vector<1x1x32xf32>
    %9 = vector.shape_cast %8 : vector<1x1x32xf32> to vector<1x32xf32>
    %10 = vector.broadcast %9 : vector<1x32xf32> to vector<64x32xf32>
    %11 = arith.addf %7, %10 : vector<64x32xf32>
    %12 = vector.shape_cast %11 : vector<64x32xf32> to vector<8x8x32xf32>
    %c0_9 = arith.constant 0 : index
    %c0_10 = arith.constant 0 : index
    %c0_11 = arith.constant 0 : index
    %13 = vector.load %arg8[%c0_9, %c0_10, %c0_11] : memref<8x8x32xf32, #tpu.memory_space<vmem>>, vector<8x8x32xf32>
    tpu.vector_store %arg8[%c0_9, %c0_10, %c0_11], %12 {strides = array<i32>} : memref<8x8x32xf32, #tpu.memory_space<vmem>>, vector<8x8x32xf32>,
    %c1 = arith.constant 1 : index
    %c0_12 = arith.constant 0 : index
    %c0_13 = arith.constant 0 : index
    %14 = vector.load %arg3[%c1, %c0_12, %c0_13] : memref<4x16x32xf32, #tpu.memory_space<vmem>>, vector<1x16x32xf32>
    %15 = vector.shape_cast %14 : vector<1x16x32xf32> to vector<16x32xf32>
    %cst_14 = arith.constant dense<0.000000e+00> : vector<64x32xf32>
    %16 = tpu.matmul %4, %15, %cst_14 {dimension_numbers = #tpu.dot_dimension_numbers<[1], [0], [0], [1], [0, 0, 1, 1], [], []>} : vector<64x16xf32>, vector<16x32xf32>, vector<64x32xf32> -> vector<64x32xf32>
    %c1_15 = arith.constant 1 : index
    %c0_16 = arith.constant 0 : index
    %c0_17 = arith.constant 0 : index
    %17 = vector.load %arg5[%c1_15, %c0_16, %c0_17] : memref<4x1x32xf32, #tpu.memory_space<vmem>>, vector<1x1x32xf32>
    %18 = vector.shape_cast %17 : vector<1x1x32xf32> to vector<1x32xf32>
    %19 = vector.broadcast %18 : vector<1x32xf32> to vector<64x32xf32>
    %20 = arith.addf %16, %19 : vector<64x32xf32>
    %21 = vector.shape_cast %20 : vector<64x32xf32> to vector<8x8x32xf32>
    %c0_18 = arith.constant 0 : index
    %c0_19 = arith.constant 0 : index
    %c0_20 = arith.constant 0 : index
    %22 = vector.load %arg9[%c0_18, %c0_19, %c0_20] : memref<8x8x32xf32, #tpu.memory_space<vmem>>, vector<8x8x32xf32>
    tpu.vector_store %arg9[%c0_18, %c0_19, %c0_20], %21 {strides = array<i32>} : memref<8x8x32xf32, #tpu.memory_space<vmem>>, vector<8x8x32xf32>,
    %c2 = arith.constant 2 : index
    %c0_21 = arith.constant 0 : index
    %c0_22 = arith.constant 0 : index
    %23 = vector.load %arg3[%c2, %c0_21, %c0_22] : memref<4x16x32xf32, #tpu.memory_space<vmem>>, vector<1x16x32xf32>
    %24 = vector.shape_cast %23 : vector<1x16x32xf32> to vector<16x32xf32>
    %cst_23 = arith.constant dense<0.000000e+00> : vector<64x32xf32>
    %25 = tpu.matmul %4, %24, %cst_23 {dimension_numbers = #tpu.dot_dimension_numbers<[1], [0], [0], [1], [0, 0, 1, 1], [], []>} : vector<64x16xf32>, vector<16x32xf32>, vector<64x32xf32> -> vector<64x32xf32>
    %c2_24 = arith.constant 2 : index
    %c0_25 = arith.constant 0 : index
    %c0_26 = arith.constant 0 : index
    %26 = vector.load %arg5[%c2_24, %c0_25, %c0_26] : memref<4x1x32xf32, #tpu.memory_space<vmem>>, vector<1x1x32xf32>
    %27 = vector.shape_cast %26 : vector<1x1x32xf32> to vector<1x32xf32>
    %28 = vector.broadcast %27 : vector<1x32xf32> to vector<64x32xf32>
    %29 = arith.addf %25, %28 : vector<64x32xf32>
    %30 = vector.shape_cast %29 : vector<64x32xf32> to vector<8x8x32xf32>
    %c0_27 = arith.constant 0 : index
    %c0_28 = arith.constant 0 : index
    %c0_29 = arith.constant 0 : index
    %31 = vector.load %arg10[%c0_27, %c0_28, %c0_29] : memref<8x8x32xf32, #tpu.memory_space<vmem>>, vector<8x8x32xf32>
    tpu.vector_store %arg10[%c0_27, %c0_28, %c0_29], %30 {strides = array<i32>} : memref<8x8x32xf32, #tpu.memory_space<vmem>>, vector<8x8x32xf32>,
    %c3 = arith.constant 3 : index
    %c0_30 = arith.constant 0 : index
    %c0_31 = arith.constant 0 : index
    %32 = vector.load %arg3[%c3, %c0_30, %c0_31] : memref<4x16x32xf32, #tpu.memory_space<vmem>>, vector<1x16x32xf32>
    %33 = vector.shape_cast %32 : vector<1x16x32xf32> to vector<16x32xf32>
    %cst_32 = arith.constant dense<0.000000e+00> : vector<64x32xf32>
    %34 = tpu.matmul %4, %33, %cst_32 {dimension_numbers = #tpu.dot_dimension_numbers<[1], [0], [0], [1], [0, 0, 1, 1], [], []>} : vector<64x16xf32>, vector<16x32xf32>, vector<64x32xf32> -> vector<64x32xf32>
    %c3_33 = arith.constant 3 : index
    %c0_34 = arith.constant 0 : index
    %c0_35 = arith.constant 0 : index
    %35 = vector.load %arg5[%c3_33, %c0_34, %c0_35] : memref<4x1x32xf32, #tpu.memory_space<vmem>>, vector<1x1x32xf32>
    %36 = vector.shape_cast %35 : vector<1x1x32xf32> to vector<1x32xf32>
    %37 = vector.broadcast %36 : vector<1x32xf32> to vector<64x32xf32>
    %38 = arith.addf %34, %37 : vector<64x32xf32>
    %39 = vector.shape_cast %38 : vector<64x32xf32> to vector<8x8x32xf32>
    %c0_36 = arith.constant 0 : index
    %c0_37 = arith.constant 0 : index
    %c0_38 = arith.constant 0 : index
    %40 = vector.load %arg11[%c0_36, %c0_37, %c0_38] : memref<8x8x32xf32, #tpu.memory_space<vmem>>, vector<8x8x32xf32>
    tpu.vector_store %arg11[%c0_36, %c0_37, %c0_38], %39 {strides = array<i32>} : memref<8x8x32xf32, #tpu.memory_space<vmem>>, vector<8x8x32xf32>,
    %c0_39 = arith.constant 0 : index
    %c0_40 = arith.constant 0 : index
    %c0_41 = arith.constant 0 : index
    %41 = vector.load %arg4[%c0_39, %c0_40, %c0_41] : memref<4x32x32xf32, #tpu.memory_space<vmem>>, vector<4x32x32xf32>
    %c0_42 = arith.constant 0 : index
    %c0_43 = arith.constant 0 : index
    %42 = vector.load %arg6[%c0_42, %c0_43] : memref<8x32xf32, #tpu.memory_space<vmem>>, vector<8x32xf32>
    %c0_44 = arith.constant 0 : index
    %c0_45 = arith.constant 0 : index
    %43 = vector.load %arg7[%c0_44, %c0_45] : memref<8x32xf32, #tpu.memory_space<vmem>>, vector<8x32xf32>
    %c0_i32_46 = arith.constant 0 : i32
    %44 = arith.index_cast %c0_i32_46 : i32 to index
    %c0_47 = arith.constant 0 : index
    %c0_48 = arith.constant 0 : index
    %45 = vector.load %arg8[%44, %c0_47, %c0_48] : memref<8x8x32xf32, #tpu.memory_space<vmem>>, vector<1x8x32xf32>
    %46 = vector.shape_cast %45 : vector<1x8x32xf32> to vector<8x32xf32>
    %47 = vector.extract_strided_slice %41 {offsets = [0, 0, 0], sizes = [1, 32, 32], strides = [1, 1, 1]} : vector<4x32x32xf32> to vector<1x32x32xf32>
    %48 = vector.shape_cast %47 : vector<1x32x32xf32> to vector<32x32xf32>
    %cst_49 = arith.constant dense<0.000000e+00> : vector<8x32xf32>
    %49 = tpu.matmul %42, %48, %cst_49 {dimension_numbers = #tpu.dot_dimension_numbers<[1], [0], [0], [1], [0, 0, 1, 1], [], []>} : vector<8x32xf32>, vector<32x32xf32>, vector<8x32xf32> -> vector<8x32xf32>
    %50 = arith.addf %46, %49 : vector<8x32xf32>
    %cst_50 = arith.constant 5.000000e-01 : f32
    %51 = vector.broadcast %cst_50 : f32 to vector<8x32xf32>
    %52 = arith.mulf %51, %50 : vector<8x32xf32>
    %53 = math.tanh %52 : vector<8x32xf32>
    %cst_51 = arith.constant 5.000000e-01 : f32
    %54 = vector.broadcast %cst_51 : f32 to vector<8x32xf32>
    %55 = arith.mulf %54, %53 : vector<8x32xf32>
    %cst_52 = arith.constant 5.000000e-01 : f32
    %56 = vector.broadcast %cst_52 : f32 to vector<8x32xf32>
    %57 = arith.addf %55, %56 : vector<8x32xf32>
    %58 = arith.index_cast %c0_i32_46 : i32 to index
    %c0_53 = arith.constant 0 : index
    %c0_54 = arith.constant 0 : index
    %59 = vector.load %arg9[%58, %c0_53, %c0_54] : memref<8x8x32xf32, #tpu.memory_space<vmem>>, vector<1x8x32xf32>
    %60 = vector.shape_cast %59 : vector<1x8x32xf32> to vector<8x32xf32>
    %61 = vector.extract_strided_slice %41 {offsets = [1, 0, 0], sizes = [1, 32, 32], strides = [1, 1, 1]} : vector<4x32x32xf32> to vector<1x32x32xf32>
    %62 = vector.shape_cast %61 : vector<1x32x32xf32> to vector<32x32xf32>
    %cst_55 = arith.constant dense<0.000000e+00> : vector<8x32xf32>
    %63 = tpu.matmul %42, %62, %cst_55 {dimension_numbers = #tpu.dot_dimension_numbers<[1], [0], [0], [1], [0, 0, 1, 1], [], []>} : vector<8x32xf32>, vector<32x32xf32>, vector<8x32xf32> -> vector<8x32xf32>
    %64 = arith.addf %60, %63 : vector<8x32xf32>
    %cst_56 = arith.constant 5.000000e-01 : f32
    %65 = vector.broadcast %cst_56 : f32 to vector<8x32xf32>
    %66 = arith.mulf %65, %64 : vector<8x32xf32>
    %67 = math.tanh %66 : vector<8x32xf32>
    %cst_57 = arith.constant 5.000000e-01 : f32
    %68 = vector.broadcast %cst_57 : f32 to vector<8x32xf32>
    %69 = arith.mulf %68, %67 : vector<8x32xf32>
    %cst_58 = arith.constant 5.000000e-01 : f32
    %70 = vector.broadcast %cst_58 : f32 to vector<8x32xf32>
    %71 = arith.addf %69, %70 : vector<8x32xf32>
    %72 = arith.index_cast %c0_i32_46 : i32 to index
    %c0_59 = arith.constant 0 : index
    %c0_60 = arith.constant 0 : index
    %73 = vector.load %arg10[%72, %c0_59, %c0_60] : memref<8x8x32xf32, #tpu.memory_space<vmem>>, vector<1x8x32xf32>
    %74 = vector.shape_cast %73 : vector<1x8x32xf32> to vector<8x32xf32>
    %75 = vector.extract_strided_slice %41 {offsets = [2, 0, 0], sizes = [1, 32, 32], strides = [1, 1, 1]} : vector<4x32x32xf32> to vector<1x32x32xf32>
    %76 = vector.shape_cast %75 : vector<1x32x32xf32> to vector<32x32xf32>
    %cst_61 = arith.constant dense<0.000000e+00> : vector<8x32xf32>
    %77 = tpu.matmul %42, %76, %cst_61 {dimension_numbers = #tpu.dot_dimension_numbers<[1], [0], [0], [1], [0, 0, 1, 1], [], []>} : vector<8x32xf32>, vector<32x32xf32>, vector<8x32xf32> -> vector<8x32xf32>
    %78 = arith.addf %74, %77 : vector<8x32xf32>
    %79 = math.tanh %78 : vector<8x32xf32>
    %80 = arith.index_cast %c0_i32_46 : i32 to index
    %c0_62 = arith.constant 0 : index
    %c0_63 = arith.constant 0 : index
    %81 = vector.load %arg11[%80, %c0_62, %c0_63] : memref<8x8x32xf32, #tpu.memory_space<vmem>>, vector<1x8x32xf32>
    %82 = vector.shape_cast %81 : vector<1x8x32xf32> to vector<8x32xf32>
    %83 = vector.extract_strided_slice %41 {offsets = [3, 0, 0], sizes = [1, 32, 32], strides = [1, 1, 1]} : vector<4x32x32xf32> to vector<1x32x32xf32>
    %84 = vector.shape_cast %83 : vector<1x32x32xf32> to vector<32x32xf32>
    %cst_64 = arith.constant dense<0.000000e+00> : vector<8x32xf32>
    %85 = tpu.matmul %42, %84, %cst_64 {dimension_numbers = #tpu.dot_dimension_numbers<[1], [0], [0], [1], [0, 0, 1, 1], [], []>} : vector<8x32xf32>, vector<32x32xf32>, vector<8x32xf32> -> vector<8x32xf32>
    %86 = arith.addf %82, %85 : vector<8x32xf32>
    %cst_65 = arith.constant 5.000000e-01 : f32
    %87 = vector.broadcast %cst_65 : f32 to vector<8x32xf32>
    %88 = arith.mulf %87, %86 : vector<8x32xf32>
    %89 = math.tanh %88 : vector<8x32xf32>
    %cst_66 = arith.constant 5.000000e-01 : f32
    %90 = vector.broadcast %cst_66 : f32 to vector<8x32xf32>
    %91 = arith.mulf %90, %89 : vector<8x32xf32>
    %cst_67 = arith.constant 5.000000e-01 : f32
    %92 = vector.broadcast %cst_67 : f32 to vector<8x32xf32>
    %93 = arith.addf %91, %92 : vector<8x32xf32>
    %94 = arith.mulf %71, %43 : vector<8x32xf32>
    %95 = arith.mulf %57, %79 : vector<8x32xf32>
    %96 = arith.addf %94, %95 : vector<8x32xf32>
    %97 = math.tanh %96 : vector<8x32xf32>
    %98 = arith.mulf %93, %97 : vector<8x32xf32>
    %c1_i32 = arith.constant 1 : i32
    %99 = arith.index_cast %c1_i32 : i32 to index
    %c0_68 = arith.constant 0 : index
    %c0_69 = arith.constant 0 : index
    %100 = vector.load %arg8[%99, %c0_68, %c0_69] : memref<8x8x32xf32, #tpu.memory_space<vmem>>, vector<1x8x32xf32>
    %101 = vector.shape_cast %100 : vector<1x8x32xf32> to vector<8x32xf32>
    %102 = vector.extract_strided_slice %41 {offsets = [0, 0, 0], sizes = [1, 32, 32], strides = [1, 1, 1]} : vector<4x32x32xf32> to vector<1x32x32xf32>
    %103 = vector.shape_cast %102 : vector<1x32x32xf32> to vector<32x32xf32>
    %cst_70 = arith.constant dense<0.000000e+00> : vector<8x32xf32>
    %104 = tpu.matmul %98, %103, %cst_70 {dimension_numbers = #tpu.dot_dimension_numbers<[1], [0], [0], [1], [0, 0, 1, 1], [], []>} : vector<8x32xf32>, vector<32x32xf32>, vector<8x32xf32> -> vector<8x32xf32>
    %105 = arith.addf %101, %104 : vector<8x32xf32>
    %cst_71 = arith.constant 5.000000e-01 : f32
    %106 = vector.broadcast %cst_71 : f32 to vector<8x32xf32>
    %107 = arith.mulf %106, %105 : vector<8x32xf32>
    %108 = math.tanh %107 : vector<8x32xf32>
    %cst_72 = arith.constant 5.000000e-01 : f32
    %109 = vector.broadcast %cst_72 : f32 to vector<8x32xf32>
    %110 = arith.mulf %109, %108 : vector<8x32xf32>
    %cst_73 = arith.constant 5.000000e-01 : f32
    %111 = vector.broadcast %cst_73 : f32 to vector<8x32xf32>
    %112 = arith.addf %110, %111 : vector<8x32xf32>
    %113 = arith.index_cast %c1_i32 : i32 to index
    %c0_74 = arith.constant 0 : index
    %c0_75 = arith.constant 0 : index
    %114 = vector.load %arg9[%113, %c0_74, %c0_75] : memref<8x8x32xf32, #tpu.memory_space<vmem>>, vector<1x8x32xf32>
    %115 = vector.shape_cast %114 : vector<1x8x32xf32> to vector<8x32xf32>
    %116 = vector.extract_strided_slice %41 {offsets = [1, 0, 0], sizes = [1, 32, 32], strides = [1, 1, 1]} : vector<4x32x32xf32> to vector<1x32x32xf32>
    %117 = vector.shape_cast %116 : vector<1x32x32xf32> to vector<32x32xf32>
    %cst_76 = arith.constant dense<0.000000e+00> : vector<8x32xf32>
    %118 = tpu.matmul %98, %117, %cst_76 {dimension_numbers = #tpu.dot_dimension_numbers<[1], [0], [0], [1], [0, 0, 1, 1], [], []>} : vector<8x32xf32>, vector<32x32xf32>, vector<8x32xf32> -> vector<8x32xf32>
    %119 = arith.addf %115, %118 : vector<8x32xf32>
    %cst_77 = arith.constant 5.000000e-01 : f32
    %120 = vector.broadcast %cst_77 : f32 to vector<8x32xf32>
    %121 = arith.mulf %120, %119 : vector<8x32xf32>
    %122 = math.tanh %121 : vector<8x32xf32>
    %cst_78 = arith.constant 5.000000e-01 : f32
    %123 = vector.broadcast %cst_78 : f32 to vector<8x32xf32>
    %124 = arith.mulf %123, %122 : vector<8x32xf32>
    %cst_79 = arith.constant 5.000000e-01 : f32
    %125 = vector.broadcast %cst_79 : f32 to vector<8x32xf32>
    %126 = arith.addf %124, %125 : vector<8x32xf32>
    %127 = arith.index_cast %c1_i32 : i32 to index
    %c0_80 = arith.constant 0 : index
    %c0_81 = arith.constant 0 : index
    %128 = vector.load %arg10[%127, %c0_80, %c0_81] : memref<8x8x32xf32, #tpu.memory_space<vmem>>, vector<1x8x32xf32>
    %129 = vector.shape_cast %128 : vector<1x8x32xf32> to vector<8x32xf32>
    %130 = vector.extract_strided_slice %41 {offsets = [2, 0, 0], sizes = [1, 32, 32], strides = [1, 1, 1]} : vector<4x32x32xf32> to vector<1x32x32xf32>
    %131 = vector.shape_cast %130 : vector<1x32x32xf32> to vector<32x32xf32>
    %cst_82 = arith.constant dense<0.000000e+00> : vector<8x32xf32>
    %132 = tpu.matmul %98, %131, %cst_82 {dimension_numbers = #tpu.dot_dimension_numbers<[1], [0], [0], [1], [0, 0, 1, 1], [], []>} : vector<8x32xf32>, vector<32x32xf32>, vector<8x32xf32> -> vector<8x32xf32>
    %133 = arith.addf %129, %132 : vector<8x32xf32>
    %134 = math.tanh %133 : vector<8x32xf32>
    %135 = arith.index_cast %c1_i32 : i32 to index
    %c0_83 = arith.constant 0 : index
    %c0_84 = arith.constant 0 : index
    %136 = vector.load %arg11[%135, %c0_83, %c0_84] : memref<8x8x32xf32, #tpu.memory_space<vmem>>, vector<1x8x32xf32>
    %137 = vector.shape_cast %136 : vector<1x8x32xf32> to vector<8x32xf32>
    %138 = vector.extract_strided_slice %41 {offsets = [3, 0, 0], sizes = [1, 32, 32], strides = [1, 1, 1]} : vector<4x32x32xf32> to vector<1x32x32xf32>
    %139 = vector.shape_cast %138 : vector<1x32x32xf32> to vector<32x32xf32>
    %cst_85 = arith.constant dense<0.000000e+00> : vector<8x32xf32>
    %140 = tpu.matmul %98, %139, %cst_85 {dimension_numbers = #tpu.dot_dimension_numbers<[1], [0], [0], [1], [0, 0, 1, 1], [], []>} : vector<8x32xf32>, vector<32x32xf32>, vector<8x32xf32> -> vector<8x32xf32>
    %141 = arith.addf %137, %140 : vector<8x32xf32>
    %cst_86 = arith.constant 5.000000e-01 : f32
    %142 = vector.broadcast %cst_86 : f32 to vector<8x32xf32>
    %143 = arith.mulf %142, %141 : vector<8x32xf32>
    %144 = math.tanh %143 : vector<8x32xf32>
    %cst_87 = arith.constant 5.000000e-01 : f32
    %145 = vector.broadcast %cst_87 : f32 to vector<8x32xf32>
    %146 = arith.mulf %145, %144 : vector<8x32xf32>
    %cst_88 = arith.constant 5.000000e-01 : f32
    %147 = vector.broadcast %cst_88 : f32 to vector<8x32xf32>
    %148 = arith.addf %146, %147 : vector<8x32xf32>
    %149 = arith.mulf %126, %96 : vector<8x32xf32>
    %150 = arith.mulf %112, %134 : vector<8x32xf32>
    %151 = arith.addf %149, %150 : vector<8x32xf32>
    %152 = math.tanh %151 : vector<8x32xf32>
    %153 = arith.mulf %148, %152 : vector<8x32xf32>
    %c2_i32 = arith.constant 2 : i32
    %154 = arith.index_cast %c2_i32 : i32 to index
    %c0_89 = arith.constant 0 : index
    %c0_90 = arith.constant 0 : index
    %155 = vector.load %arg8[%154, %c0_89, %c0_90] : memref<8x8x32xf32, #tpu.memory_space<vmem>>, vector<1x8x32xf32>
    %156 = vector.shape_cast %155 : vector<1x8x32xf32> to vector<8x32xf32>
    %157 = vector.extract_strided_slice %41 {offsets = [0, 0, 0], sizes = [1, 32, 32], strides = [1, 1, 1]} : vector<4x32x32xf32> to vector<1x32x32xf32>
    %158 = vector.shape_cast %157 : vector<1x32x32xf32> to vector<32x32xf32>
    %cst_91 = arith.constant dense<0.000000e+00> : vector<8x32xf32>
    %159 = tpu.matmul %153, %158, %cst_91 {dimension_numbers = #tpu.dot_dimension_numbers<[1], [0], [0], [1], [0, 0, 1, 1], [], []>} : vector<8x32xf32>, vector<32x32xf32>, vector<8x32xf32> -> vector<8x32xf32>
    %160 = arith.addf %156, %159 : vector<8x32xf32>
    %cst_92 = arith.constant 5.000000e-01 : f32
    %161 = vector.broadcast %cst_92 : f32 to vector<8x32xf32>
    %162 = arith.mulf %161, %160 : vector<8x32xf32>
    %163 = math.tanh %162 : vector<8x32xf32>
    %cst_93 = arith.constant 5.000000e-01 : f32
    %164 = vector.broadcast %cst_93 : f32 to vector<8x32xf32>
    %165 = arith.mulf %164, %163 : vector<8x32xf32>
    %cst_94 = arith.constant 5.000000e-01 : f32
    %166 = vector.broadcast %cst_94 : f32 to vector<8x32xf32>
    %167 = arith.addf %165, %166 : vector<8x32xf32>
    %168 = arith.index_cast %c2_i32 : i32 to index
    %c0_95 = arith.constant 0 : index
    %c0_96 = arith.constant 0 : index
    %169 = vector.load %arg9[%168, %c0_95, %c0_96] : memref<8x8x32xf32, #tpu.memory_space<vmem>>, vector<1x8x32xf32>
    %170 = vector.shape_cast %169 : vector<1x8x32xf32> to vector<8x32xf32>
    %171 = vector.extract_strided_slice %41 {offsets = [1, 0, 0], sizes = [1, 32, 32], strides = [1, 1, 1]} : vector<4x32x32xf32> to vector<1x32x32xf32>
    %172 = vector.shape_cast %171 : vector<1x32x32xf32> to vector<32x32xf32>
    %cst_97 = arith.constant dense<0.000000e+00> : vector<8x32xf32>
    %173 = tpu.matmul %153, %172, %cst_97 {dimension_numbers = #tpu.dot_dimension_numbers<[1], [0], [0], [1], [0, 0, 1, 1], [], []>} : vector<8x32xf32>, vector<32x32xf32>, vector<8x32xf32> -> vector<8x32xf32>
    %174 = arith.addf %170, %173 : vector<8x32xf32>
    %cst_98 = arith.constant 5.000000e-01 : f32
    %175 = vector.broadcast %cst_98 : f32 to vector<8x32xf32>
    %176 = arith.mulf %175, %174 : vector<8x32xf32>
    %177 = math.tanh %176 : vector<8x32xf32>
    %cst_99 = arith.constant 5.000000e-01 : f32
    %178 = vector.broadcast %cst_99 : f32 to vector<8x32xf32>
    %179 = arith.mulf %178, %177 : vector<8x32xf32>
    %cst_100 = arith.constant 5.000000e-01 : f32
    %180 = vector.broadcast %cst_100 : f32 to vector<8x32xf32>
    %181 = arith.addf %179, %180 : vector<8x32xf32>
    %182 = arith.index_cast %c2_i32 : i32 to index
    %c0_101 = arith.constant 0 : index
    %c0_102 = arith.constant 0 : index
    %183 = vector.load %arg10[%182, %c0_101, %c0_102] : memref<8x8x32xf32, #tpu.memory_space<vmem>>, vector<1x8x32xf32>
    %184 = vector.shape_cast %183 : vector<1x8x32xf32> to vector<8x32xf32>
    %185 = vector.extract_strided_slice %41 {offsets = [2, 0, 0], sizes = [1, 32, 32], strides = [1, 1, 1]} : vector<4x32x32xf32> to vector<1x32x32xf32>
    %186 = vector.shape_cast %185 : vector<1x32x32xf32> to vector<32x32xf32>
    %cst_103 = arith.constant dense<0.000000e+00> : vector<8x32xf32>
    %187 = tpu.matmul %153, %186, %cst_103 {dimension_numbers = #tpu.dot_dimension_numbers<[1], [0], [0], [1], [0, 0, 1, 1], [], []>} : vector<8x32xf32>, vector<32x32xf32>, vector<8x32xf32> -> vector<8x32xf32>
    %188 = arith.addf %184, %187 : vector<8x32xf32>
    %189 = math.tanh %188 : vector<8x32xf32>
    %190 = arith.index_cast %c2_i32 : i32 to index
    %c0_104 = arith.constant 0 : index
    %c0_105 = arith.constant 0 : index
    %191 = vector.load %arg11[%190, %c0_104, %c0_105] : memref<8x8x32xf32, #tpu.memory_space<vmem>>, vector<1x8x32xf32>
    %192 = vector.shape_cast %191 : vector<1x8x32xf32> to vector<8x32xf32>
    %193 = vector.extract_strided_slice %41 {offsets = [3, 0, 0], sizes = [1, 32, 32], strides = [1, 1, 1]} : vector<4x32x32xf32> to vector<1x32x32xf32>
    %194 = vector.shape_cast %193 : vector<1x32x32xf32> to vector<32x32xf32>
    %cst_106 = arith.constant dense<0.000000e+00> : vector<8x32xf32>
    %195 = tpu.matmul %153, %194, %cst_106 {dimension_numbers = #tpu.dot_dimension_numbers<[1], [0], [0], [1], [0, 0, 1, 1], [], []>} : vector<8x32xf32>, vector<32x32xf32>, vector<8x32xf32> -> vector<8x32xf32>
    %196 = arith.addf %192, %195 : vector<8x32xf32>
    %cst_107 = arith.constant 5.000000e-01 : f32
    %197 = vector.broadcast %cst_107 : f32 to vector<8x32xf32>
    %198 = arith.mulf %197, %196 : vector<8x32xf32>
    %199 = math.tanh %198 : vector<8x32xf32>
    %cst_108 = arith.constant 5.000000e-01 : f32
    %200 = vector.broadcast %cst_108 : f32 to vector<8x32xf32>
    %201 = arith.mulf %200, %199 : vector<8x32xf32>
    %cst_109 = arith.constant 5.000000e-01 : f32
    %202 = vector.broadcast %cst_109 : f32 to vector<8x32xf32>
    %203 = arith.addf %201, %202 : vector<8x32xf32>
    %204 = arith.mulf %181, %151 : vector<8x32xf32>
    %205 = arith.mulf %167, %189 : vector<8x32xf32>
    %206 = arith.addf %204, %205 : vector<8x32xf32>
    %207 = math.tanh %206 : vector<8x32xf32>
    %208 = arith.mulf %203, %207 : vector<8x32xf32>
    %c3_i32 = arith.constant 3 : i32
    %209 = arith.index_cast %c3_i32 : i32 to index
    %c0_110 = arith.constant 0 : index
    %c0_111 = arith.constant 0 : index
    %210 = vector.load %arg8[%209, %c0_110, %c0_111] : memref<8x8x32xf32, #tpu.memory_space<vmem>>, vector<1x8x32xf32>
    %211 = vector.shape_cast %210 : vector<1x8x32xf32> to vector<8x32xf32>
    %212 = vector.extract_strided_slice %41 {offsets = [0, 0, 0], sizes = [1, 32, 32], strides = [1, 1, 1]} : vector<4x32x32xf32> to vector<1x32x32xf32>
    %213 = vector.shape_cast %212 : vector<1x32x32xf32> to vector<32x32xf32>
    %cst_112 = arith.constant dense<0.000000e+00> : vector<8x32xf32>
    %214 = tpu.matmul %208, %213, %cst_112 {dimension_numbers = #tpu.dot_dimension_numbers<[1], [0], [0], [1], [0, 0, 1, 1], [], []>} : vector<8x32xf32>, vector<32x32xf32>, vector<8x32xf32> -> vector<8x32xf32>
    %215 = arith.addf %211, %214 : vector<8x32xf32>
    %cst_113 = arith.constant 5.000000e-01 : f32
    %216 = vector.broadcast %cst_113 : f32 to vector<8x32xf32>
    %217 = arith.mulf %216, %215 : vector<8x32xf32>
    %218 = math.tanh %217 : vector<8x32xf32>
    %cst_114 = arith.constant 5.000000e-01 : f32
    %219 = vector.broadcast %cst_114 : f32 to vector<8x32xf32>
    %220 = arith.mulf %219, %218 : vector<8x32xf32>
    %cst_115 = arith.constant 5.000000e-01 : f32
    %221 = vector.broadcast %cst_115 : f32 to vector<8x32xf32>
    %222 = arith.addf %220, %221 : vector<8x32xf32>
    %223 = arith.index_cast %c3_i32 : i32 to index
    %c0_116 = arith.constant 0 : index
    %c0_117 = arith.constant 0 : index
    %224 = vector.load %arg9[%223, %c0_116, %c0_117] : memref<8x8x32xf32, #tpu.memory_space<vmem>>, vector<1x8x32xf32>
    %225 = vector.shape_cast %224 : vector<1x8x32xf32> to vector<8x32xf32>
    %226 = vector.extract_strided_slice %41 {offsets = [1, 0, 0], sizes = [1, 32, 32], strides = [1, 1, 1]} : vector<4x32x32xf32> to vector<1x32x32xf32>
    %227 = vector.shape_cast %226 : vector<1x32x32xf32> to vector<32x32xf32>
    %cst_118 = arith.constant dense<0.000000e+00> : vector<8x32xf32>
    %228 = tpu.matmul %208, %227, %cst_118 {dimension_numbers = #tpu.dot_dimension_numbers<[1], [0], [0], [1], [0, 0, 1, 1], [], []>} : vector<8x32xf32>, vector<32x32xf32>, vector<8x32xf32> -> vector<8x32xf32>
    %229 = arith.addf %225, %228 : vector<8x32xf32>
    %cst_119 = arith.constant 5.000000e-01 : f32
    %230 = vector.broadcast %cst_119 : f32 to vector<8x32xf32>
    %231 = arith.mulf %230, %229 : vector<8x32xf32>
    %232 = math.tanh %231 : vector<8x32xf32>
    %cst_120 = arith.constant 5.000000e-01 : f32
    %233 = vector.broadcast %cst_120 : f32 to vector<8x32xf32>
    %234 = arith.mulf %233, %232 : vector<8x32xf32>
    %cst_121 = arith.constant 5.000000e-01 : f32
    %235 = vector.broadcast %cst_121 : f32 to vector<8x32xf32>
    %236 = arith.addf %234, %235 : vector<8x32xf32>
    %237 = arith.index_cast %c3_i32 : i32 to index
    %c0_122 = arith.constant 0 : index
    %c0_123 = arith.constant 0 : index
    %238 = vector.load %arg10[%237, %c0_122, %c0_123] : memref<8x8x32xf32, #tpu.memory_space<vmem>>, vector<1x8x32xf32>
    %239 = vector.shape_cast %238 : vector<1x8x32xf32> to vector<8x32xf32>
    %240 = vector.extract_strided_slice %41 {offsets = [2, 0, 0], sizes = [1, 32, 32], strides = [1, 1, 1]} : vector<4x32x32xf32> to vector<1x32x32xf32>
    %241 = vector.shape_cast %240 : vector<1x32x32xf32> to vector<32x32xf32>
    %cst_124 = arith.constant dense<0.000000e+00> : vector<8x32xf32>
    %242 = tpu.matmul %208, %241, %cst_124 {dimension_numbers = #tpu.dot_dimension_numbers<[1], [0], [0], [1], [0, 0, 1, 1], [], []>} : vector<8x32xf32>, vector<32x32xf32>, vector<8x32xf32> -> vector<8x32xf32>
    %243 = arith.addf %239, %242 : vector<8x32xf32>
    %244 = math.tanh %243 : vector<8x32xf32>
    %245 = arith.index_cast %c3_i32 : i32 to index
    %c0_125 = arith.constant 0 : index
    %c0_126 = arith.constant 0 : index
    %246 = vector.load %arg11[%245, %c0_125, %c0_126] : memref<8x8x32xf32, #tpu.memory_space<vmem>>, vector<1x8x32xf32>
    %247 = vector.shape_cast %246 : vector<1x8x32xf32> to vector<8x32xf32>
    %248 = vector.extract_strided_slice %41 {offsets = [3, 0, 0], sizes = [1, 32, 32], strides = [1, 1, 1]} : vector<4x32x32xf32> to vector<1x32x32xf32>
    %249 = vector.shape_cast %248 : vector<1x32x32xf32> to vector<32x32xf32>
    %cst_127 = arith.constant dense<0.000000e+00> : vector<8x32xf32>
    %250 = tpu.matmul %208, %249, %cst_127 {dimension_numbers = #tpu.dot_dimension_numbers<[1], [0], [0], [1], [0, 0, 1, 1], [], []>} : vector<8x32xf32>, vector<32x32xf32>, vector<8x32xf32> -> vector<8x32xf32>
    %251 = arith.addf %247, %250 : vector<8x32xf32>
    %cst_128 = arith.constant 5.000000e-01 : f32
    %252 = vector.broadcast %cst_128 : f32 to vector<8x32xf32>
    %253 = arith.mulf %252, %251 : vector<8x32xf32>
    %254 = math.tanh %253 : vector<8x32xf32>
    %cst_129 = arith.constant 5.000000e-01 : f32
    %255 = vector.broadcast %cst_129 : f32 to vector<8x32xf32>
    %256 = arith.mulf %255, %254 : vector<8x32xf32>
    %cst_130 = arith.constant 5.000000e-01 : f32
    %257 = vector.broadcast %cst_130 : f32 to vector<8x32xf32>
    %258 = arith.addf %256, %257 : vector<8x32xf32>
    %259 = arith.mulf %236, %206 : vector<8x32xf32>
    %260 = arith.mulf %222, %244 : vector<8x32xf32>
    %261 = arith.addf %259, %260 : vector<8x32xf32>
    %262 = math.tanh %261 : vector<8x32xf32>
    %263 = arith.mulf %258, %262 : vector<8x32xf32>
    %c4_i32 = arith.constant 4 : i32
    %264 = arith.index_cast %c4_i32 : i32 to index
    %c0_131 = arith.constant 0 : index
    %c0_132 = arith.constant 0 : index
    %265 = vector.load %arg8[%264, %c0_131, %c0_132] : memref<8x8x32xf32, #tpu.memory_space<vmem>>, vector<1x8x32xf32>
    %266 = vector.shape_cast %265 : vector<1x8x32xf32> to vector<8x32xf32>
    %267 = vector.extract_strided_slice %41 {offsets = [0, 0, 0], sizes = [1, 32, 32], strides = [1, 1, 1]} : vector<4x32x32xf32> to vector<1x32x32xf32>
    %268 = vector.shape_cast %267 : vector<1x32x32xf32> to vector<32x32xf32>
    %cst_133 = arith.constant dense<0.000000e+00> : vector<8x32xf32>
    %269 = tpu.matmul %263, %268, %cst_133 {dimension_numbers = #tpu.dot_dimension_numbers<[1], [0], [0], [1], [0, 0, 1, 1], [], []>} : vector<8x32xf32>, vector<32x32xf32>, vector<8x32xf32> -> vector<8x32xf32>
    %270 = arith.addf %266, %269 : vector<8x32xf32>
    %cst_134 = arith.constant 5.000000e-01 : f32
    %271 = vector.broadcast %cst_134 : f32 to vector<8x32xf32>
    %272 = arith.mulf %271, %270 : vector<8x32xf32>
    %273 = math.tanh %272 : vector<8x32xf32>
    %cst_135 = arith.constant 5.000000e-01 : f32
    %274 = vector.broadcast %cst_135 : f32 to vector<8x32xf32>
    %275 = arith.mulf %274, %273 : vector<8x32xf32>
    %cst_136 = arith.constant 5.000000e-01 : f32
    %276 = vector.broadcast %cst_136 : f32 to vector<8x32xf32>
    %277 = arith.addf %275, %276 : vector<8x32xf32>
    %278 = arith.index_cast %c4_i32 : i32 to index
    %c0_137 = arith.constant 0 : index
    %c0_138 = arith.constant 0 : index
    %279 = vector.load %arg9[%278, %c0_137, %c0_138] : memref<8x8x32xf32, #tpu.memory_space<vmem>>, vector<1x8x32xf32>
    %280 = vector.shape_cast %279 : vector<1x8x32xf32> to vector<8x32xf32>
    %281 = vector.extract_strided_slice %41 {offsets = [1, 0, 0], sizes = [1, 32, 32], strides = [1, 1, 1]} : vector<4x32x32xf32> to vector<1x32x32xf32>
    %282 = vector.shape_cast %281 : vector<1x32x32xf32> to vector<32x32xf32>
    %cst_139 = arith.constant dense<0.000000e+00> : vector<8x32xf32>
    %283 = tpu.matmul %263, %282, %cst_139 {dimension_numbers = #tpu.dot_dimension_numbers<[1], [0], [0], [1], [0, 0, 1, 1], [], []>} : vector<8x32xf32>, vector<32x32xf32>, vector<8x32xf32> -> vector<8x32xf32>
    %284 = arith.addf %280, %283 : vector<8x32xf32>
    %cst_140 = arith.constant 5.000000e-01 : f32
    %285 = vector.broadcast %cst_140 : f32 to vector<8x32xf32>
    %286 = arith.mulf %285, %284 : vector<8x32xf32>
    %287 = math.tanh %286 : vector<8x32xf32>
    %cst_141 = arith.constant 5.000000e-01 : f32
    %288 = vector.broadcast %cst_141 : f32 to vector<8x32xf32>
    %289 = arith.mulf %288, %287 : vector<8x32xf32>
    %cst_142 = arith.constant 5.000000e-01 : f32
    %290 = vector.broadcast %cst_142 : f32 to vector<8x32xf32>
    %291 = arith.addf %289, %290 : vector<8x32xf32>
    %292 = arith.index_cast %c4_i32 : i32 to index
    %c0_143 = arith.constant 0 : index
    %c0_144 = arith.constant 0 : index
    %293 = vector.load %arg10[%292, %c0_143, %c0_144] : memref<8x8x32xf32, #tpu.memory_space<vmem>>, vector<1x8x32xf32>
    %294 = vector.shape_cast %293 : vector<1x8x32xf32> to vector<8x32xf32>
    %295 = vector.extract_strided_slice %41 {offsets = [2, 0, 0], sizes = [1, 32, 32], strides = [1, 1, 1]} : vector<4x32x32xf32> to vector<1x32x32xf32>
    %296 = vector.shape_cast %295 : vector<1x32x32xf32> to vector<32x32xf32>
    %cst_145 = arith.constant dense<0.000000e+00> : vector<8x32xf32>
    %297 = tpu.matmul %263, %296, %cst_145 {dimension_numbers = #tpu.dot_dimension_numbers<[1], [0], [0], [1], [0, 0, 1, 1], [], []>} : vector<8x32xf32>, vector<32x32xf32>, vector<8x32xf32> -> vector<8x32xf32>
    %298 = arith.addf %294, %297 : vector<8x32xf32>
    %299 = math.tanh %298 : vector<8x32xf32>
    %300 = arith.index_cast %c4_i32 : i32 to index
    %c0_146 = arith.constant 0 : index
    %c0_147 = arith.constant 0 : index
    %301 = vector.load %arg11[%300, %c0_146, %c0_147] : memref<8x8x32xf32, #tpu.memory_space<vmem>>, vector<1x8x32xf32>
    %302 = vector.shape_cast %301 : vector<1x8x32xf32> to vector<8x32xf32>
    %303 = vector.extract_strided_slice %41 {offsets = [3, 0, 0], sizes = [1, 32, 32], strides = [1, 1, 1]} : vector<4x32x32xf32> to vector<1x32x32xf32>
    %304 = vector.shape_cast %303 : vector<1x32x32xf32> to vector<32x32xf32>
    %cst_148 = arith.constant dense<0.000000e+00> : vector<8x32xf32>
    %305 = tpu.matmul %263, %304, %cst_148 {dimension_numbers = #tpu.dot_dimension_numbers<[1], [0], [0], [1], [0, 0, 1, 1], [], []>} : vector<8x32xf32>, vector<32x32xf32>, vector<8x32xf32> -> vector<8x32xf32>
    %306 = arith.addf %302, %305 : vector<8x32xf32>
    %cst_149 = arith.constant 5.000000e-01 : f32
    %307 = vector.broadcast %cst_149 : f32 to vector<8x32xf32>
    %308 = arith.mulf %307, %306 : vector<8x32xf32>
    %309 = math.tanh %308 : vector<8x32xf32>
    %cst_150 = arith.constant 5.000000e-01 : f32
    %310 = vector.broadcast %cst_150 : f32 to vector<8x32xf32>
    %311 = arith.mulf %310, %309 : vector<8x32xf32>
    %cst_151 = arith.constant 5.000000e-01 : f32
    %312 = vector.broadcast %cst_151 : f32 to vector<8x32xf32>
    %313 = arith.addf %311, %312 : vector<8x32xf32>
    %314 = arith.mulf %291, %261 : vector<8x32xf32>
    %315 = arith.mulf %277, %299 : vector<8x32xf32>
    %316 = arith.addf %314, %315 : vector<8x32xf32>
    %317 = math.tanh %316 : vector<8x32xf32>
    %318 = arith.mulf %313, %317 : vector<8x32xf32>
    %c5_i32 = arith.constant 5 : i32
    %319 = arith.index_cast %c5_i32 : i32 to index
    %c0_152 = arith.constant 0 : index
    %c0_153 = arith.constant 0 : index
    %320 = vector.load %arg8[%319, %c0_152, %c0_153] : memref<8x8x32xf32, #tpu.memory_space<vmem>>, vector<1x8x32xf32>
    %321 = vector.shape_cast %320 : vector<1x8x32xf32> to vector<8x32xf32>
    %322 = vector.extract_strided_slice %41 {offsets = [0, 0, 0], sizes = [1, 32, 32], strides = [1, 1, 1]} : vector<4x32x32xf32> to vector<1x32x32xf32>
    %323 = vector.shape_cast %322 : vector<1x32x32xf32> to vector<32x32xf32>
    %cst_154 = arith.constant dense<0.000000e+00> : vector<8x32xf32>
    %324 = tpu.matmul %318, %323, %cst_154 {dimension_numbers = #tpu.dot_dimension_numbers<[1], [0], [0], [1], [0, 0, 1, 1], [], []>} : vector<8x32xf32>, vector<32x32xf32>, vector<8x32xf32> -> vector<8x32xf32>
    %325 = arith.addf %321, %324 : vector<8x32xf32>
    %cst_155 = arith.constant 5.000000e-01 : f32
    %326 = vector.broadcast %cst_155 : f32 to vector<8x32xf32>
    %327 = arith.mulf %326, %325 : vector<8x32xf32>
    %328 = math.tanh %327 : vector<8x32xf32>
    %cst_156 = arith.constant 5.000000e-01 : f32
    %329 = vector.broadcast %cst_156 : f32 to vector<8x32xf32>
    %330 = arith.mulf %329, %328 : vector<8x32xf32>
    %cst_157 = arith.constant 5.000000e-01 : f32
    %331 = vector.broadcast %cst_157 : f32 to vector<8x32xf32>
    %332 = arith.addf %330, %331 : vector<8x32xf32>
    %333 = arith.index_cast %c5_i32 : i32 to index
    %c0_158 = arith.constant 0 : index
    %c0_159 = arith.constant 0 : index
    %334 = vector.load %arg9[%333, %c0_158, %c0_159] : memref<8x8x32xf32, #tpu.memory_space<vmem>>, vector<1x8x32xf32>
    %335 = vector.shape_cast %334 : vector<1x8x32xf32> to vector<8x32xf32>
    %336 = vector.extract_strided_slice %41 {offsets = [1, 0, 0], sizes = [1, 32, 32], strides = [1, 1, 1]} : vector<4x32x32xf32> to vector<1x32x32xf32>
    %337 = vector.shape_cast %336 : vector<1x32x32xf32> to vector<32x32xf32>
    %cst_160 = arith.constant dense<0.000000e+00> : vector<8x32xf32>
    %338 = tpu.matmul %318, %337, %cst_160 {dimension_numbers = #tpu.dot_dimension_numbers<[1], [0], [0], [1], [0, 0, 1, 1], [], []>} : vector<8x32xf32>, vector<32x32xf32>, vector<8x32xf32> -> vector<8x32xf32>
    %339 = arith.addf %335, %338 : vector<8x32xf32>
    %cst_161 = arith.constant 5.000000e-01 : f32
    %340 = vector.broadcast %cst_161 : f32 to vector<8x32xf32>
    %341 = arith.mulf %340, %339 : vector<8x32xf32>
    %342 = math.tanh %341 : vector<8x32xf32>
    %cst_162 = arith.constant 5.000000e-01 : f32
    %343 = vector.broadcast %cst_162 : f32 to vector<8x32xf32>
    %344 = arith.mulf %343, %342 : vector<8x32xf32>
    %cst_163 = arith.constant 5.000000e-01 : f32
    %345 = vector.broadcast %cst_163 : f32 to vector<8x32xf32>
    %346 = arith.addf %344, %345 : vector<8x32xf32>
    %347 = arith.index_cast %c5_i32 : i32 to index
    %c0_164 = arith.constant 0 : index
    %c0_165 = arith.constant 0 : index
    %348 = vector.load %arg10[%347, %c0_164, %c0_165] : memref<8x8x32xf32, #tpu.memory_space<vmem>>, vector<1x8x32xf32>
    %349 = vector.shape_cast %348 : vector<1x8x32xf32> to vector<8x32xf32>
    %350 = vector.extract_strided_slice %41 {offsets = [2, 0, 0], sizes = [1, 32, 32], strides = [1, 1, 1]} : vector<4x32x32xf32> to vector<1x32x32xf32>
    %351 = vector.shape_cast %350 : vector<1x32x32xf32> to vector<32x32xf32>
    %cst_166 = arith.constant dense<0.000000e+00> : vector<8x32xf32>
    %352 = tpu.matmul %318, %351, %cst_166 {dimension_numbers = #tpu.dot_dimension_numbers<[1], [0], [0], [1], [0, 0, 1, 1], [], []>} : vector<8x32xf32>, vector<32x32xf32>, vector<8x32xf32> -> vector<8x32xf32>
    %353 = arith.addf %349, %352 : vector<8x32xf32>
    %354 = math.tanh %353 : vector<8x32xf32>
    %355 = arith.index_cast %c5_i32 : i32 to index
    %c0_167 = arith.constant 0 : index
    %c0_168 = arith.constant 0 : index
    %356 = vector.load %arg11[%355, %c0_167, %c0_168] : memref<8x8x32xf32, #tpu.memory_space<vmem>>, vector<1x8x32xf32>
    %357 = vector.shape_cast %356 : vector<1x8x32xf32> to vector<8x32xf32>
    %358 = vector.extract_strided_slice %41 {offsets = [3, 0, 0], sizes = [1, 32, 32], strides = [1, 1, 1]} : vector<4x32x32xf32> to vector<1x32x32xf32>
    %359 = vector.shape_cast %358 : vector<1x32x32xf32> to vector<32x32xf32>
    %cst_169 = arith.constant dense<0.000000e+00> : vector<8x32xf32>
    %360 = tpu.matmul %318, %359, %cst_169 {dimension_numbers = #tpu.dot_dimension_numbers<[1], [0], [0], [1], [0, 0, 1, 1], [], []>} : vector<8x32xf32>, vector<32x32xf32>, vector<8x32xf32> -> vector<8x32xf32>
    %361 = arith.addf %357, %360 : vector<8x32xf32>
    %cst_170 = arith.constant 5.000000e-01 : f32
    %362 = vector.broadcast %cst_170 : f32 to vector<8x32xf32>
    %363 = arith.mulf %362, %361 : vector<8x32xf32>
    %364 = math.tanh %363 : vector<8x32xf32>
    %cst_171 = arith.constant 5.000000e-01 : f32
    %365 = vector.broadcast %cst_171 : f32 to vector<8x32xf32>
    %366 = arith.mulf %365, %364 : vector<8x32xf32>
    %cst_172 = arith.constant 5.000000e-01 : f32
    %367 = vector.broadcast %cst_172 : f32 to vector<8x32xf32>
    %368 = arith.addf %366, %367 : vector<8x32xf32>
    %369 = arith.mulf %346, %316 : vector<8x32xf32>
    %370 = arith.mulf %332, %354 : vector<8x32xf32>
    %371 = arith.addf %369, %370 : vector<8x32xf32>
    %372 = math.tanh %371 : vector<8x32xf32>
    %373 = arith.mulf %368, %372 : vector<8x32xf32>
    %c6_i32 = arith.constant 6 : i32
    %374 = arith.index_cast %c6_i32 : i32 to index
    %c0_173 = arith.constant 0 : index
    %c0_174 = arith.constant 0 : index
    %375 = vector.load %arg8[%374, %c0_173, %c0_174] : memref<8x8x32xf32, #tpu.memory_space<vmem>>, vector<1x8x32xf32>
    %376 = vector.shape_cast %375 : vector<1x8x32xf32> to vector<8x32xf32>
    %377 = vector.extract_strided_slice %41 {offsets = [0, 0, 0], sizes = [1, 32, 32], strides = [1, 1, 1]} : vector<4x32x32xf32> to vector<1x32x32xf32>
    %378 = vector.shape_cast %377 : vector<1x32x32xf32> to vector<32x32xf32>
    %cst_175 = arith.constant dense<0.000000e+00> : vector<8x32xf32>
    %379 = tpu.matmul %373, %378, %cst_175 {dimension_numbers = #tpu.dot_dimension_numbers<[1], [0], [0], [1], [0, 0, 1, 1], [], []>} : vector<8x32xf32>, vector<32x32xf32>, vector<8x32xf32> -> vector<8x32xf32>
    %380 = arith.addf %376, %379 : vector<8x32xf32>
    %cst_176 = arith.constant 5.000000e-01 : f32
    %381 = vector.broadcast %cst_176 : f32 to vector<8x32xf32>
    %382 = arith.mulf %381, %380 : vector<8x32xf32>
    %383 = math.tanh %382 : vector<8x32xf32>
    %cst_177 = arith.constant 5.000000e-01 : f32
    %384 = vector.broadcast %cst_177 : f32 to vector<8x32xf32>
    %385 = arith.mulf %384, %383 : vector<8x32xf32>
    %cst_178 = arith.constant 5.000000e-01 : f32
    %386 = vector.broadcast %cst_178 : f32 to vector<8x32xf32>
    %387 = arith.addf %385, %386 : vector<8x32xf32>
    %388 = arith.index_cast %c6_i32 : i32 to index
    %c0_179 = arith.constant 0 : index
    %c0_180 = arith.constant 0 : index
    %389 = vector.load %arg9[%388, %c0_179, %c0_180] : memref<8x8x32xf32, #tpu.memory_space<vmem>>, vector<1x8x32xf32>
    %390 = vector.shape_cast %389 : vector<1x8x32xf32> to vector<8x32xf32>
    %391 = vector.extract_strided_slice %41 {offsets = [1, 0, 0], sizes = [1, 32, 32], strides = [1, 1, 1]} : vector<4x32x32xf32> to vector<1x32x32xf32>
    %392 = vector.shape_cast %391 : vector<1x32x32xf32> to vector<32x32xf32>
    %cst_181 = arith.constant dense<0.000000e+00> : vector<8x32xf32>
    %393 = tpu.matmul %373, %392, %cst_181 {dimension_numbers = #tpu.dot_dimension_numbers<[1], [0], [0], [1], [0, 0, 1, 1], [], []>} : vector<8x32xf32>, vector<32x32xf32>, vector<8x32xf32> -> vector<8x32xf32>
    %394 = arith.addf %390, %393 : vector<8x32xf32>
    %cst_182 = arith.constant 5.000000e-01 : f32
    %395 = vector.broadcast %cst_182 : f32 to vector<8x32xf32>
    %396 = arith.mulf %395, %394 : vector<8x32xf32>
    %397 = math.tanh %396 : vector<8x32xf32>
    %cst_183 = arith.constant 5.000000e-01 : f32
    %398 = vector.broadcast %cst_183 : f32 to vector<8x32xf32>
    %399 = arith.mulf %398, %397 : vector<8x32xf32>
    %cst_184 = arith.constant 5.000000e-01 : f32
    %400 = vector.broadcast %cst_184 : f32 to vector<8x32xf32>
    %401 = arith.addf %399, %400 : vector<8x32xf32>
    %402 = arith.index_cast %c6_i32 : i32 to index
    %c0_185 = arith.constant 0 : index
    %c0_186 = arith.constant 0 : index
    %403 = vector.load %arg10[%402, %c0_185, %c0_186] : memref<8x8x32xf32, #tpu.memory_space<vmem>>, vector<1x8x32xf32>
    %404 = vector.shape_cast %403 : vector<1x8x32xf32> to vector<8x32xf32>
    %405 = vector.extract_strided_slice %41 {offsets = [2, 0, 0], sizes = [1, 32, 32], strides = [1, 1, 1]} : vector<4x32x32xf32> to vector<1x32x32xf32>
    %406 = vector.shape_cast %405 : vector<1x32x32xf32> to vector<32x32xf32>
    %cst_187 = arith.constant dense<0.000000e+00> : vector<8x32xf32>
    %407 = tpu.matmul %373, %406, %cst_187 {dimension_numbers = #tpu.dot_dimension_numbers<[1], [0], [0], [1], [0, 0, 1, 1], [], []>} : vector<8x32xf32>, vector<32x32xf32>, vector<8x32xf32> -> vector<8x32xf32>
    %408 = arith.addf %404, %407 : vector<8x32xf32>
    %409 = math.tanh %408 : vector<8x32xf32>
    %410 = arith.index_cast %c6_i32 : i32 to index
    %c0_188 = arith.constant 0 : index
    %c0_189 = arith.constant 0 : index
    %411 = vector.load %arg11[%410, %c0_188, %c0_189] : memref<8x8x32xf32, #tpu.memory_space<vmem>>, vector<1x8x32xf32>
    %412 = vector.shape_cast %411 : vector<1x8x32xf32> to vector<8x32xf32>
    %413 = vector.extract_strided_slice %41 {offsets = [3, 0, 0], sizes = [1, 32, 32], strides = [1, 1, 1]} : vector<4x32x32xf32> to vector<1x32x32xf32>
    %414 = vector.shape_cast %413 : vector<1x32x32xf32> to vector<32x32xf32>
    %cst_190 = arith.constant dense<0.000000e+00> : vector<8x32xf32>
    %415 = tpu.matmul %373, %414, %cst_190 {dimension_numbers = #tpu.dot_dimension_numbers<[1], [0], [0], [1], [0, 0, 1, 1], [], []>} : vector<8x32xf32>, vector<32x32xf32>, vector<8x32xf32> -> vector<8x32xf32>
    %416 = arith.addf %412, %415 : vector<8x32xf32>
    %cst_191 = arith.constant 5.000000e-01 : f32
    %417 = vector.broadcast %cst_191 : f32 to vector<8x32xf32>
    %418 = arith.mulf %417, %416 : vector<8x32xf32>
    %419 = math.tanh %418 : vector<8x32xf32>
    %cst_192 = arith.constant 5.000000e-01 : f32
    %420 = vector.broadcast %cst_192 : f32 to vector<8x32xf32>
    %421 = arith.mulf %420, %419 : vector<8x32xf32>
    %cst_193 = arith.constant 5.000000e-01 : f32
    %422 = vector.broadcast %cst_193 : f32 to vector<8x32xf32>
    %423 = arith.addf %421, %422 : vector<8x32xf32>
    %424 = arith.mulf %401, %371 : vector<8x32xf32>
    %425 = arith.mulf %387, %409 : vector<8x32xf32>
    %426 = arith.addf %424, %425 : vector<8x32xf32>
    %427 = math.tanh %426 : vector<8x32xf32>
    %428 = arith.mulf %423, %427 : vector<8x32xf32>
    %c7_i32 = arith.constant 7 : i32
    %429 = arith.index_cast %c7_i32 : i32 to index
    %c0_194 = arith.constant 0 : index
    %c0_195 = arith.constant 0 : index
    %430 = vector.load %arg8[%429, %c0_194, %c0_195] : memref<8x8x32xf32, #tpu.memory_space<vmem>>, vector<1x8x32xf32>
    %431 = vector.shape_cast %430 : vector<1x8x32xf32> to vector<8x32xf32>
    %432 = vector.extract_strided_slice %41 {offsets = [0, 0, 0], sizes = [1, 32, 32], strides = [1, 1, 1]} : vector<4x32x32xf32> to vector<1x32x32xf32>
    %433 = vector.shape_cast %432 : vector<1x32x32xf32> to vector<32x32xf32>
    %cst_196 = arith.constant dense<0.000000e+00> : vector<8x32xf32>
    %434 = tpu.matmul %428, %433, %cst_196 {dimension_numbers = #tpu.dot_dimension_numbers<[1], [0], [0], [1], [0, 0, 1, 1], [], []>} : vector<8x32xf32>, vector<32x32xf32>, vector<8x32xf32> -> vector<8x32xf32>
    %435 = arith.addf %431, %434 : vector<8x32xf32>
    %cst_197 = arith.constant 5.000000e-01 : f32
    %436 = vector.broadcast %cst_197 : f32 to vector<8x32xf32>
    %437 = arith.mulf %436, %435 : vector<8x32xf32>
    %438 = math.tanh %437 : vector<8x32xf32>
    %cst_198 = arith.constant 5.000000e-01 : f32
    %439 = vector.broadcast %cst_198 : f32 to vector<8x32xf32>
    %440 = arith.mulf %439, %438 : vector<8x32xf32>
    %cst_199 = arith.constant 5.000000e-01 : f32
    %441 = vector.broadcast %cst_199 : f32 to vector<8x32xf32>
    %442 = arith.addf %440, %441 : vector<8x32xf32>
    %443 = arith.index_cast %c7_i32 : i32 to index
    %c0_200 = arith.constant 0 : index
    %c0_201 = arith.constant 0 : index
    %444 = vector.load %arg9[%443, %c0_200, %c0_201] : memref<8x8x32xf32, #tpu.memory_space<vmem>>, vector<1x8x32xf32>
    %445 = vector.shape_cast %444 : vector<1x8x32xf32> to vector<8x32xf32>
    %446 = vector.extract_strided_slice %41 {offsets = [1, 0, 0], sizes = [1, 32, 32], strides = [1, 1, 1]} : vector<4x32x32xf32> to vector<1x32x32xf32>
    %447 = vector.shape_cast %446 : vector<1x32x32xf32> to vector<32x32xf32>
    %cst_202 = arith.constant dense<0.000000e+00> : vector<8x32xf32>
    %448 = tpu.matmul %428, %447, %cst_202 {dimension_numbers = #tpu.dot_dimension_numbers<[1], [0], [0], [1], [0, 0, 1, 1], [], []>} : vector<8x32xf32>, vector<32x32xf32>, vector<8x32xf32> -> vector<8x32xf32>
    %449 = arith.addf %445, %448 : vector<8x32xf32>
    %cst_203 = arith.constant 5.000000e-01 : f32
    %450 = vector.broadcast %cst_203 : f32 to vector<8x32xf32>
    %451 = arith.mulf %450, %449 : vector<8x32xf32>
    %452 = math.tanh %451 : vector<8x32xf32>
    %cst_204 = arith.constant 5.000000e-01 : f32
    %453 = vector.broadcast %cst_204 : f32 to vector<8x32xf32>
    %454 = arith.mulf %453, %452 : vector<8x32xf32>
    %cst_205 = arith.constant 5.000000e-01 : f32
    %455 = vector.broadcast %cst_205 : f32 to vector<8x32xf32>
    %456 = arith.addf %454, %455 : vector<8x32xf32>
    %457 = arith.index_cast %c7_i32 : i32 to index
    %c0_206 = arith.constant 0 : index
    %c0_207 = arith.constant 0 : index
    %458 = vector.load %arg10[%457, %c0_206, %c0_207] : memref<8x8x32xf32, #tpu.memory_space<vmem>>, vector<1x8x32xf32>
    %459 = vector.shape_cast %458 : vector<1x8x32xf32> to vector<8x32xf32>
    %460 = vector.extract_strided_slice %41 {offsets = [2, 0, 0], sizes = [1, 32, 32], strides = [1, 1, 1]} : vector<4x32x32xf32> to vector<1x32x32xf32>
    %461 = vector.shape_cast %460 : vector<1x32x32xf32> to vector<32x32xf32>
    %cst_208 = arith.constant dense<0.000000e+00> : vector<8x32xf32>
    %462 = tpu.matmul %428, %461, %cst_208 {dimension_numbers = #tpu.dot_dimension_numbers<[1], [0], [0], [1], [0, 0, 1, 1], [], []>} : vector<8x32xf32>, vector<32x32xf32>, vector<8x32xf32> -> vector<8x32xf32>
    %463 = arith.addf %459, %462 : vector<8x32xf32>
    %464 = math.tanh %463 : vector<8x32xf32>
    %465 = arith.index_cast %c7_i32 : i32 to index
    %c0_209 = arith.constant 0 : index
    %c0_210 = arith.constant 0 : index
    %466 = vector.load %arg11[%465, %c0_209, %c0_210] : memref<8x8x32xf32, #tpu.memory_space<vmem>>, vector<1x8x32xf32>
    %467 = vector.shape_cast %466 : vector<1x8x32xf32> to vector<8x32xf32>
    %468 = vector.extract_strided_slice %41 {offsets = [3, 0, 0], sizes = [1, 32, 32], strides = [1, 1, 1]} : vector<4x32x32xf32> to vector<1x32x32xf32>
    %469 = vector.shape_cast %468 : vector<1x32x32xf32> to vector<32x32xf32>
    %cst_211 = arith.constant dense<0.000000e+00> : vector<8x32xf32>
    %470 = tpu.matmul %428, %469, %cst_211 {dimension_numbers = #tpu.dot_dimension_numbers<[1], [0], [0], [1], [0, 0, 1, 1], [], []>} : vector<8x32xf32>, vector<32x32xf32>, vector<8x32xf32> -> vector<8x32xf32>
    %471 = arith.addf %467, %470 : vector<8x32xf32>
    %cst_212 = arith.constant 5.000000e-01 : f32
    %472 = vector.broadcast %cst_212 : f32 to vector<8x32xf32>
    %473 = arith.mulf %472, %471 : vector<8x32xf32>
    %474 = math.tanh %473 : vector<8x32xf32>
    %cst_213 = arith.constant 5.000000e-01 : f32
    %475 = vector.broadcast %cst_213 : f32 to vector<8x32xf32>
    %476 = arith.mulf %475, %474 : vector<8x32xf32>
    %cst_214 = arith.constant 5.000000e-01 : f32
    %477 = vector.broadcast %cst_214 : f32 to vector<8x32xf32>
    %478 = arith.addf %476, %477 : vector<8x32xf32>
    %479 = arith.mulf %456, %426 : vector<8x32xf32>
    %480 = arith.mulf %442, %464 : vector<8x32xf32>
    %481 = arith.addf %479, %480 : vector<8x32xf32>
    %482 = math.tanh %481 : vector<8x32xf32>
    %483 = arith.mulf %478, %482 : vector<8x32xf32>
    %c8_i32 = arith.constant 8 : i32
    %c0_215 = arith.constant 0 : index
    %c0_216 = arith.constant 0 : index
    %484 = vector.load %arg6[%c0_215, %c0_216] : memref<8x32xf32, #tpu.memory_space<vmem>>, vector<8x32xf32>
    tpu.vector_store %arg6[%c0_215, %c0_216], %483 {strides = array<i32>} : memref<8x32xf32, #tpu.memory_space<vmem>>, vector<8x32xf32>,
    %c0_217 = arith.constant 0 : index
    %c0_218 = arith.constant 0 : index
    %485 = vector.load %arg7[%c0_217, %c0_218] : memref<8x32xf32, #tpu.memory_space<vmem>>, vector<8x32xf32>
    tpu.vector_store %arg7[%c0_217, %c0_218], %481 {strides = array<i32>} : memref<8x32xf32, #tpu.memory_space<vmem>>, vector<8x32xf32>,
    return
  }
  func.func @transform_0(%arg0: i32, %arg1: i32) -> (i32, i32, i32) {
    %c0_i32 = arith.constant 0 : i32
    %c0_i32_0 = arith.constant 0 : i32
    return %arg1, %arg0, %c0_i32 : i32, i32, i32
  }
  func.func @transform_1(%arg0: i32, %arg1: i32) -> (i32, i32, i32) {
    %c0_i32 = arith.constant 0 : i32
    %c0_i32_0 = arith.constant 0 : i32
    %c0_i32_1 = arith.constant 0 : i32
    %c0_i32_2 = arith.constant 0 : i32
    return %c0_i32, %c0_i32_0, %c0_i32_1 : i32, i32, i32
  }
  func.func @transform_2(%arg0: i32, %arg1: i32) -> (i32, i32, i32) {
    %c0_i32 = arith.constant 0 : i32
    %c0_i32_0 = arith.constant 0 : i32
    %c0_i32_1 = arith.constant 0 : i32
    %c0_i32_2 = arith.constant 0 : i32
    return %c0_i32, %c0_i32_0, %c0_i32_1 : i32, i32, i32
  }
  func.func @transform_3(%arg0: i32, %arg1: i32) -> (i32, i32, i32) {
    %c0_i32 = arith.constant 0 : i32
    %c0_i32_0 = arith.constant 0 : i32
    %c0_i32_1 = arith.constant 0 : i32
    %c0_i32_2 = arith.constant 0 : i32
    return %c0_i32, %c0_i32_0, %c0_i32_1 : i32, i32, i32
  }
  func.func @transform_4(%arg0: i32, %arg1: i32) -> (i32, i32) {
    %c0_i32 = arith.constant 0 : i32
    %c0_i32_0 = arith.constant 0 : i32
    return %arg0, %c0_i32 : i32, i32
  }
}

</mosaic_0001>

<llo_original>
// kernel: rnn_lstm_pallas.1
$region0: #{rnn_lstm_pallas.1}
  #allocation0 [shape = 'u32[]', space=smem, size = 0x4, offset = 0x4, fixed_abs, tag = 'smem constant byte address 0x4 - core index']
  #allocation1 [shape = 'u32[72,128]{1,0:T(1,128)}', space=vmem, size = 0x9000, scoped, tag = 'internal scratch']
  #allocation2 [shape = 'f32[8,32]{1,0:T(8,128)}', space=vmem, size = 0x1000, scoped, tag = 'scratch operand']
  #allocation3 [shape = 'f32[8,8,32]{2,1,0:T(8,128)}', space=vmem, size = 0x8000, scoped, tag = 'scratch operand']
  #allocation4 [shape = 'f32[8,8,32]{2,1,0:T(8,128)}', space=vmem, size = 0x8000, scoped, tag = 'scratch operand']
  #allocation5 [shape = 'f32[8,8,32]{2,1,0:T(8,128)}', space=vmem, size = 0x8000, scoped, tag = 'scratch operand']
  #allocation6 [shape = 'f32[8,8,32]{2,1,0:T(8,128)}', space=vmem, size = 0x8000, scoped, tag = 'scratch operand']
  %s0 = inlined_call_operand.vmem [shape: f32[8,8,16], index: 0, kind: input, shape index: {}]
  %s1 = inlined_call_operand.vmem [shape: f32[4,16,32], index: 1, kind: input, shape index: {}]
  %s2 = inlined_call_operand.vmem [shape: f32[4,32,32], index: 2, kind: input, shape index: {}]
  %s3 = inlined_call_operand.vmem [shape: f32[4,1,32], index: 3, kind: input, shape index: {}]
  %s4 = inlined_call_operand.hbm [shape: f32[8,32], index: 4, kind: output, shape index: {}]
  %s5 = sld [smem:[#allocation0]]
  $region30: #{rnn_lstm_pallas.1} parent=0
    _
  %s7 = ssub.s32 1, %s5
  %s8 = scalar_select 0, %s7, %s5
  $region1: #{rnn_lstm_pallas.1} parent=0
    #allocation7 [shape = 'u8[4096]{0}', space=vmem, size = 0x1000, scoped, tag = 'output window, operand 0, single buffered']
    #allocation8 [shape = 's32[1]{0}', space=sflag, size = 0x4, scoped, tag = 'scoped memory for rnn_lstm_pallas.1']
    %9 = vsyncpa [#allocation8], 0
    // Predicated region
    $region2: #{rnn_lstm_pallas.1} parent=1 // pred_check
      _
    $region3: #{rnn_lstm_pallas.1} parent=1 // pred_check_branch
      %11 = sbr.rel (0) target = $region5
    $region4: #{rnn_lstm_pallas.1} parent=1 // pred_region
      _
    $region5: #{rnn_lstm_pallas.1} parent=1 // pred_fallthru
      _
    // Predicated region
    $region6: #{rnn_lstm_pallas.1} parent=1 // pred_check
      _
    $region7: #{rnn_lstm_pallas.1} parent=1 // pred_check_branch
      %13 = sbr.rel (0) target = $region9
    $region8: #{rnn_lstm_pallas.1} parent=1 // pred_region
      _
    $region9: #{rnn_lstm_pallas.1} parent=1 // pred_fallthru
      _
    // Predicated region
    $region10: #{rnn_lstm_pallas.1} parent=1 // pred_check
      _
    $region11: #{rnn_lstm_pallas.1} parent=1 // pred_check_branch
      %15 = sbr.rel (0) target = $region13
    $region12: #{rnn_lstm_pallas.1} parent=1 // pred_region
      _
    $region13: #{rnn_lstm_pallas.1} parent=1 // pred_fallthru
      _
    // Predicated region
    $region14: #{rnn_lstm_pallas.1} parent=1 // pred_check
      _
    $region15: #{rnn_lstm_pallas.1} parent=1 // pred_check_branch
      %17 = sbr.rel (0) target = $region17
    $region16: #{rnn_lstm_pallas.1} parent=1 // pred_region
      _
    $region17: #{rnn_lstm_pallas.1} parent=1 // pred_fallthru
      _
    %p18 = scmp.eq.s32.totalorder 0, 0
    // Predicated region
    $region18: #{rnn_lstm_pallas.1} parent=1 // pred_check
      %p19 = pneg %p18
    $region19: #{rnn_lstm_pallas.1} parent=1 // pred_check_branch
      %21 = sbr.rel (%p19) target = $region21
    $region20: #{rnn_lstm_pallas.1} parent=1 // pred_region
      %vm22 = vcmask 261120
      %23 = vst.msk [vmem:[#allocation7] sm:$0xff] %vm22, 0.0
      %24 = vst.msk [vmem:[#allocation2] sm:$0xff] %vm22, 0.0
    $region21: #{rnn_lstm_pallas.1} parent=1 // pred_fallthru
      _
    %v25 = vld [vmem:[%s0] sm:$0xff]
    %v26 = vld [vmem:[%s0 + $0x8] sm:$0xff]
    %v27 = vld [vmem:[%s0 + $0x10] sm:$0xff]
    %v28 = vld [vmem:[%s0 + $0x18] sm:$0xff]
    %v29 = vld [vmem:[%s0 + $0x20] sm:$0xff]
    %v30 = vld [vmem:[%s0 + $0x28] sm:$0xff]
    %v31 = vld [vmem:[%s0 + $0x30] sm:$0xff]
    %v32 = vld [vmem:[%s0 + $0x38] sm:$0xff]
    %v33 = vld [vmem:[%s1] sm:$0xff]
    %v34 = vld [vmem:[%s1 + $0x8] sm:$0xff]
    %v35 = vld [vmem:[%s3] sm:$0x1]
    %v37 = vperm.slane %v35, 0
    %vm39 = vcmask 130048
    %v41 = vsel %vm39, %v25, 0
    %v44 = vsel %vm39, %v26, 0
    %v47 = vsel %vm39, %v27, 0
    %v50 = vsel %vm39, %v28, 0
    %v53 = vsel %vm39, %v29, 0
    %v56 = vsel %vm39, %v30, 0
    %v59 = vsel %vm39, %v31, 0
    %v62 = vsel %vm39, %v32, 0
    %64 = vmatpush.msra.mxu0 0.0
    %65 = vmatpush.msra.mxu0 0.0
    %66 = vmatpush.msra.mxu0 0.0
    %67 = vmatpush.msra.mxu0 0.0
    %68 = vmatpush.msra.mxu0 0.0
    %69 = vmatpush.msra.mxu0 0.0
    %70 = vmatpush.msra.mxu0 0.0
    %71 = vmatpush.msra.mxu0 0.0
    %72 = vmatpush.msra.mxu0 0.0
    %73 = vmatpush.msra.mxu0 0.0
    %74 = vmatpush.msra.mxu0 0.0
    %75 = vmatpush.msra.mxu0 0.0
    %76 = vmatpush.msra.mxu0 0.0
    %77 = vmatpush.msra.mxu0 0.0
    %78 = vmatpush.msra.mxu0 %v34
    %79 = vmatpush.msra.mxu0 %v33
    %80 = vmatmul.f32.gmra.mxu0 %v41
    %v81 = vpop.f32.mrf.mxu0
    %v82 = vadd.f32 %v37, %v81
    %83 = vmatmul.f32.gmra.mxu0 %v44
    %v84 = vpop.f32.mrf.mxu0
    %v85 = vadd.f32 %v37, %v84
    %86 = vmatmul.f32.gmra.mxu0 %v47
    %v87 = vpop.f32.mrf.mxu0
    %v88 = vadd.f32 %v37, %v87
    %89 = vmatmul.f32.gmra.mxu0 %v50
    %v90 = vpop.f32.mrf.mxu0
    %v91 = vadd.f32 %v37, %v90
    %92 = vmatmul.f32.gmra.mxu0 %v53
    %v93 = vpop.f32.mrf.mxu0
    %v94 = vadd.f32 %v37, %v93
    %95 = vmatmul.f32.gmra.mxu0 %v56
    %v96 = vpop.f32.mrf.mxu0
    %v97 = vadd.f32 %v37, %v96
    %98 = vmatmul.f32.gmra.mxu0 %v59
    %v99 = vpop.f32.mrf.mxu0
    %v100 = vadd.f32 %v37, %v99
    %101 = vmatmul.f32.gmra.mxu0 %v62
    %v102 = vpop.f32.mrf.mxu0
    %v103 = vadd.f32 %v37, %v102
    %104 = vdwg.mxu0
    %vm105 = vcmask 261120
    %106 = vst.msk [vmem:[#allocation3] sm:$0xff] %vm105, %v82
    %107 = vst.msk [vmem:[#allocation3 + $0x8] sm:$0xff] %vm105, %v85
    %108 = vst.msk [vmem:[#allocation3 + $0x10] sm:$0xff] %vm105, %v88
    %109 = vst.msk [vmem:[#allocation3 + $0x18] sm:$0xff] %vm105, %v91
    %110 = vst.msk [vmem:[#allocation3 + $0x20] sm:$0xff] %vm105, %v94
    %111 = vst.msk [vmem:[#allocation3 + $0x28] sm:$0xff] %vm105, %v97
    %112 = vst.msk [vmem:[#allocation3 + $0x30] sm:$0xff] %vm105, %v100
    %113 = vst.msk [vmem:[#allocation3 + $0x38] sm:$0xff] %vm105, %v103
    %s114 = scalar_lea.vmem %s1, 16
    %v115 = vld [vmem:[%s114] sm:$0xff]
    %v116 = vld [vmem:[%s114 + $0x8] sm:$0xff]
    %s117 = scalar_lea.vmem %s3, 1
    %v118 = vld [vmem:[%s117] sm:$0x1]
    %v120 = vperm.slane %v118, 0
    %122 = vmatpush.msra.mxu0 0.0
    %123 = vmatpush.msra.mxu0 0.0
    %124 = vmatpush.msra.mxu0 0.0
    %125 = vmatpush.msra.mxu0 0.0
    %126 = vmatpush.msra.mxu0 0.0
    %127 = vmatpush.msra.mxu0 0.0
    %128 = vmatpush.msra.mxu0 0.0
    %129 = vmatpush.msra.mxu0 0.0
    %130 = vmatpush.msra.mxu0 0.0
    %131 = vmatpush.msra.mxu0 0.0
    %132 = vmatpush.msra.mxu0 0.0
    %133 = vmatpush.msra.mxu0 0.0
    %134 = vmatpush.msra.mxu0 0.0
    %135 = vmatpush.msra.mxu0 0.0
    %136 = vmatpush.msra.mxu0 %v116
    %137 = vmatpush.msra.mxu0 %v115
    %138 = vmatmul.f32.gmra.mxu0 %v41
    %v139 = vpop.f32.mrf.mxu0
    %v140 = vadd.f32 %v120, %v139
    %141 = vmatmul.f32.gmra.mxu0 %v44
    %v142 = vpop.f32.mrf.mxu0
    %v143 = vadd.f32 %v120, %v142
    %144 = vmatmul.f32.gmra.mxu0 %v47
    %v145 = vpop.f32.mrf.mxu0
    %v146 = vadd.f32 %v120, %v145
    %147 = vmatmul.f32.gmra.mxu0 %v50
    %v148 = vpop.f32.mrf.mxu0
    %v149 = vadd.f32 %v120, %v148
    %150 = vmatmul.f32.gmra.mxu0 %v53
    %v151 = vpop.f32.mrf.mxu0
    %v152 = vadd.f32 %v120, %v151
    %153 = vmatmul.f32.gmra.mxu0 %v56
    %v154 = vpop.f32.mrf.mxu0
    %v155 = vadd.f32 %v120, %v154
    %156 = vmatmul.f32.gmra.mxu0 %v59
    %v157 = vpop.f32.mrf.mxu0
    %v158 = vadd.f32 %v120, %v157
    %159 = vmatmul.f32.gmra.mxu0 %v62
    %v160 = vpop.f32.mrf.mxu0
    %v161 = vadd.f32 %v120, %v160
    %162 = vdwg.mxu0
    %163 = vst.msk [vmem:[#allocation4] sm:$0xff] %vm105, %v140
    %164 = vst.msk [vmem:[#allocation4 + $0x8] sm:$0xff] %vm105, %v143
    %165 = vst.msk [vmem:[#allocation4 + $0x10] sm:$0xff] %vm105, %v146
    %166 = vst.msk [vmem:[#allocation4 + $0x18] sm:$0xff] %vm105, %v149
    %167 = vst.msk [vmem:[#allocation4 + $0x20] sm:$0xff] %vm105, %v152
    %168 = vst.msk [vmem:[#allocation4 + $0x28] sm:$0xff] %vm105, %v155
    %169 = vst.msk [vmem:[#allocation4 + $0x30] sm:$0xff] %vm105, %v158
    %170 = vst.msk [vmem:[#allocation4 + $0x38] sm:$0xff] %vm105, %v161
    %s171 = scalar_lea.vmem %s1, 32
    %v172 = vld [vmem:[%s171] sm:$0xff]
    %v173 = vld [vmem:[%s171 + $0x8] sm:$0xff]
    %s174 = scalar_lea.vmem %s3, 2
    %v175 = vld [vmem:[%s174] sm:$0x1]
    %v177 = vperm.slane %v175, 0
    %179 = vmatpush.msra.mxu0 0.0
    %180 = vmatpush.msra.mxu0 0.0
    %181 = vmatpush.msra.mxu0 0.0
    %182 = vmatpush.msra.mxu0 0.0
    %183 = vmatpush.msra.mxu0 0.0
    %184 = vmatpush.msra.mxu0 0.0
    %185 = vmatpush.msra.mxu0 0.0
    %186 = vmatpush.msra.mxu0 0.0
    %187 = vmatpush.msra.mxu0 0.0
    %188 = vmatpush.msra.mxu0 0.0
    %189 = vmatpush.msra.mxu0 0.0
    %190 = vmatpush.msra.mxu0 0.0
    %191 = vmatpush.msra.mxu0 0.0
    %192 = vmatpush.msra.mxu0 0.0
    %193 = vmatpush.msra.mxu0 %v173
    %194 = vmatpush.msra.mxu0 %v172
    %195 = vmatmul.f32.gmra.mxu0 %v41
    %v196 = vpop.f32.mrf.mxu0
    %v197 = vadd.f32 %v177, %v196
    %198 = vmatmul.f32.gmra.mxu0 %v44
    %v199 = vpop.f32.mrf.mxu0
    %v200 = vadd.f32 %v177, %v199
    %201 = vmatmul.f32.gmra.mxu0 %v47
    %v202 = vpop.f32.mrf.mxu0
    %v203 = vadd.f32 %v177, %v202
    %204 = vmatmul.f32.gmra.mxu0 %v50
    %v205 = vpop.f32.mrf.mxu0
    %v206 = vadd.f32 %v177, %v205
    %207 = vmatmul.f32.gmra.mxu0 %v53
    %v208 = vpop.f32.mrf.mxu0
    %v209 = vadd.f32 %v177, %v208
    %210 = vmatmul.f32.gmra.mxu0 %v56
    %v211 = vpop.f32.mrf.mxu0
    %v212 = vadd.f32 %v177, %v211
    %213 = vmatmul.f32.gmra.mxu0 %v59
    %v214 = vpop.f32.mrf.mxu0
    %v215 = vadd.f32 %v177, %v214
    %216 = vmatmul.f32.gmra.mxu0 %v62
    %v217 = vpop.f32.mrf.mxu0
    %v218 = vadd.f32 %v177, %v217
    %219 = vdwg.mxu0
    %220 = vst.msk [vmem:[#allocation5] sm:$0xff] %vm105, %v197
    %221 = vst.msk [vmem:[#allocation5 + $0x8] sm:$0xff] %vm105, %v200
    %222 = vst.msk [vmem:[#allocation5 + $0x10] sm:$0xff] %vm105, %v203
    %223 = vst.msk [vmem:[#allocation5 + $0x18] sm:$0xff] %vm105, %v206
    %224 = vst.msk [vmem:[#allocation5 + $0x20] sm:$0xff] %vm105, %v209
    %225 = vst.msk [vmem:[#allocation5 + $0x28] sm:$0xff] %vm105, %v212
    %226 = vst.msk [vmem:[#allocation5 + $0x30] sm:$0xff] %vm105, %v215
    %227 = vst.msk [vmem:[#allocation5 + $0x38] sm:$0xff] %vm105, %v218
    %s228 = scalar_lea.vmem %s1, 48
    %v229 = vld [vmem:[%s228] sm:$0xff]
    %v230 = vld [vmem:[%s228 + $0x8] sm:$0xff]
    %s231 = scalar_lea.vmem %s3, 3
    %v232 = vld [vmem:[%s231] sm:$0x1]
    %v234 = vperm.slane %v232, 0
    %236 = vmatpush.msra.mxu0 0.0
    %237 = vmatpush.msra.mxu0 0.0
    %238 = vmatpush.msra.mxu0 0.0
    %239 = vmatpush.msra.mxu0 0.0
    %240 = vmatpush.msra.mxu0 0.0
    %241 = vmatpush.msra.mxu0 0.0
    %242 = vmatpush.msra.mxu0 0.0
    %243 = vmatpush.msra.mxu0 0.0
    %244 = vmatpush.msra.mxu0 0.0
    %245 = vmatpush.msra.mxu0 0.0
    %246 = vmatpush.msra.mxu0 0.0
    %247 = vmatpush.msra.mxu0 0.0
    %248 = vmatpush.msra.mxu0 0.0
    %249 = vmatpush.msra.mxu0 0.0
    %250 = vmatpush.msra.mxu0 %v230
    %251 = vmatpush.msra.mxu0 %v229
    %252 = vmatmul.f32.gmra.mxu0 %v41
    %v253 = vpop.f32.mrf.mxu0
    %v254 = vadd.f32 %v234, %v253
    %255 = vmatmul.f32.gmra.mxu0 %v44
    %v256 = vpop.f32.mrf.mxu0
    %v257 = vadd.f32 %v234, %v256
    %258 = vmatmul.f32.gmra.mxu0 %v47
    %v259 = vpop.f32.mrf.mxu0
    %v260 = vadd.f32 %v234, %v259
    %261 = vmatmul.f32.gmra.mxu0 %v50
    %v262 = vpop.f32.mrf.mxu0
    %v263 = vadd.f32 %v234, %v262
    %264 = vmatmul.f32.gmra.mxu0 %v53
    %v265 = vpop.f32.mrf.mxu0
    %v266 = vadd.f32 %v234, %v265
    %267 = vmatmul.f32.gmra.mxu0 %v56
    %v268 = vpop.f32.mrf.mxu0
    %v269 = vadd.f32 %v234, %v268
    %270 = vmatmul.f32.gmra.mxu0 %v59
    %v271 = vpop.f32.mrf.mxu0
    %v272 = vadd.f32 %v234, %v271
    %273 = vmatmul.f32.gmra.mxu0 %v62
    %v274 = vpop.f32.mrf.mxu0
    %v275 = vadd.f32 %v234, %v274
    %276 = vdwg.mxu0
    %277 = vst.msk [vmem:[#allocation6] sm:$0xff] %vm105, %v254
    %278 = vst.msk [vmem:[#allocation6 + $0x8] sm:$0xff] %vm105, %v257
    %279 = vst.msk [vmem:[#allocation6 + $0x10] sm:$0xff] %vm105, %v260
    %280 = vst.msk [vmem:[#allocation6 + $0x18] sm:$0xff] %vm105, %v263
    %281 = vst.msk [vmem:[#allocation6 + $0x20] sm:$0xff] %vm105, %v266
    %282 = vst.msk [vmem:[#allocation6 + $0x28] sm:$0xff] %vm105, %v269
    %283 = vst.msk [vmem:[#allocation6 + $0x30] sm:$0xff] %vm105, %v272
    %284 = vst.msk [vmem:[#allocation6 + $0x38] sm:$0xff] %vm105, %v275
    %v285 = vld [vmem:[%s2] sm:$0xff]
    %v286 = vld [vmem:[%s2 + $0x8] sm:$0xff]
    %v287 = vld [vmem:[%s2 + $0x10] sm:$0xff]
    %v288 = vld [vmem:[%s2 + $0x18] sm:$0xff]
    %v289 = vld [vmem:[%s2 + $0x20] sm:$0xff]
    %v290 = vld [vmem:[%s2 + $0x28] sm:$0xff]
    %v291 = vld [vmem:[%s2 + $0x30] sm:$0xff]
    %v292 = vld [vmem:[%s2 + $0x38] sm:$0xff]
    %v293 = vld [vmem:[%s2 + $0x40] sm:$0xff]
    %v294 = vld [vmem:[%s2 + $0x48] sm:$0xff]
    %v295 = vld [vmem:[%s2 + $0x50] sm:$0xff]
    %v296 = vld [vmem:[%s2 + $0x58] sm:$0xff]
    %v297 = vld [vmem:[%s2 + $0x60] sm:$0xff]
    %v298 = vld [vmem:[%s2 + $0x68] sm:$0xff]
    %v299 = vld [vmem:[%s2 + $0x70] sm:$0xff]
    %v300 = vld [vmem:[%s2 + $0x78] sm:$0xff]
    %v301 = vld [vmem:[#allocation7] sm:$0xff]
    %v302 = vld [vmem:[#allocation2] sm:$0xff]
    %v303 = vld [vmem:[#allocation3] sm:$0xff]
    %v305 = vsel %vm105, %v301, 0
    %307 = vmatpush.msra.mxu0 0.0
    %308 = vmatpush.msra.mxu0 0.0
    %309 = vmatpush.msra.mxu0 0.0
    %310 = vmatpush.msra.mxu0 0.0
    %311 = vmatpush.msra.mxu0 0.0
    %312 = vmatpush.msra.mxu0 0.0
    %313 = vmatpush.msra.mxu0 0.0
    %314 = vmatpush.msra.mxu0 0.0
    %315 = vmatpush.msra.mxu0 0.0
    %316 = vmatpush.msra.mxu0 0.0
    %317 = vmatpush.msra.mxu0 0.0
    %318 = vmatpush.msra.mxu0 0.0
    %319 = vmatpush.msra.mxu0 %v288
    %320 = vmatpush.msra.mxu0 %v287
    %321 = vmatpush.msra.mxu0 %v286
    %322 = vmatpush.msra.mxu0 %v285
    %323 = vmatmul.f32.gmra.mxu0 %v305
    %v324 = vpop.f32.mrf.mxu0
    %v325 = vadd.f32 0.0, %v324
    %326 = vdwg.mxu0
    %v327 = vadd.f32 %v303, %v325
    %v328 = vmul.f32 %v327, 0.5
    %v329 = vtanh.pop %v328
    %v330 = vmul.f32 %v329, 0.5
    %v331 = vadd.f32 %v330, 0.5
    %v332 = vld [vmem:[#allocation4] sm:$0xff]
    %333 = vmatpush.msra.mxu0 0.0
    %334 = vmatpush.msra.mxu0 0.0
    %335 = vmatpush.msra.mxu0 0.0
    %336 = vmatpush.msra.mxu0 0.0
    %337 = vmatpush.msra.mxu0 0.0
    %338 = vmatpush.msra.mxu0 0.0
    %339 = vmatpush.msra.mxu0 0.0
    %340 = vmatpush.msra.mxu0 0.0
    %341 = vmatpush.msra.mxu0 0.0
    %342 = vmatpush.msra.mxu0 0.0
    %343 = vmatpush.msra.mxu0 0.0
    %344 = vmatpush.msra.mxu0 0.0
    %345 = vmatpush.msra.mxu0 %v292
    %346 = vmatpush.msra.mxu0 %v291
    %347 = vmatpush.msra.mxu0 %v290
    %348 = vmatpush.msra.mxu0 %v289
    %349 = vmatmul.f32.gmra.mxu0 %v305
    %v350 = vpop.f32.mrf.mxu0
    %v351 = vadd.f32 0.0, %v350
    %352 = vdwg.mxu0
    %v353 = vadd.f32 %v332, %v351
    %v354 = vmul.f32 %v353, 0.5
    %v355 = vtanh.pop %v354
    %v356 = vmul.f32 %v355, 0.5
    %v357 = vadd.f32 %v356, 0.5
    %v358 = vld [vmem:[#allocation5] sm:$0xff]
    %359 = vmatpush.msra.mxu0 0.0
    %360 = vmatpush.msra.mxu0 0.0
    %361 = vmatpush.msra.mxu0 0.0
    %362 = vmatpush.msra.mxu0 0.0
    %363 = vmatpush.msra.mxu0 0.0
    %364 = vmatpush.msra.mxu0 0.0
    %365 = vmatpush.msra.mxu0 0.0
    %366 = vmatpush.msra.mxu0 0.0
    %367 = vmatpush.msra.mxu0 0.0
    %368 = vmatpush.msra.mxu0 0.0
    %369 = vmatpush.msra.mxu0 0.0
    %370 = vmatpush.msra.mxu0 0.0
    %371 = vmatpush.msra.mxu0 %v296
    %372 = vmatpush.msra.mxu0 %v295
    %373 = vmatpush.msra.mxu0 %v294
    %374 = vmatpush.msra.mxu0 %v293
    %375 = vmatmul.f32.gmra.mxu0 %v305
    %v376 = vpop.f32.mrf.mxu0
    %v377 = vadd.f32 0.0, %v376
    %378 = vdwg.mxu0
    %v379 = vadd.f32 %v358, %v377
    %v380 = vtanh.pop %v379
    %v381 = vld [vmem:[#allocation6] sm:$0xff]
    %382 = vmatpush.msra.mxu0 0.0
    %383 = vmatpush.msra.mxu0 0.0
    %384 = vmatpush.msra.mxu0 0.0
    %385 = vmatpush.msra.mxu0 0.0
    %386 = vmatpush.msra.mxu0 0.0
    %387 = vmatpush.msra.mxu0 0.0
    %388 = vmatpush.msra.mxu0 0.0
    %389 = vmatpush.msra.mxu0 0.0
    %390 = vmatpush.msra.mxu0 0.0
    %391 = vmatpush.msra.mxu0 0.0
    %392 = vmatpush.msra.mxu0 0.0
    %393 = vmatpush.msra.mxu0 0.0
    %394 = vmatpush.msra.mxu0 %v300
    %395 = vmatpush.msra.mxu0 %v299
    %396 = vmatpush.msra.mxu0 %v298
    %397 = vmatpush.msra.mxu0 %v297
    %398 = vmatmul.f32.gmra.mxu0 %v305
    %v399 = vpop.f32.mrf.mxu0
    %v400 = vadd.f32 0.0, %v399
    %401 = vdwg.mxu0
    %v402 = vadd.f32 %v381, %v400
    %v403 = vmul.f32 %v402, 0.5
    %v404 = vtanh.pop %v403
    %v405 = vmul.f32 %v404, 0.5
    %v406 = vadd.f32 %v405, 0.5
    %v407 = vmul.f32 %v357, %v302
    %v408 = vmul.f32 %v331, %v380
    %v409 = vadd.f32 %v407, %v408
    %v410 = vtanh.pop %v409
    %v411 = vmul.f32 %v406, %v410
    %s412 = scalar_lea.vmem [#allocation3], 8
    %v413 = vld [vmem:[%s412] sm:$0xff]
    %v415 = vsel %vm105, %v411, 0
    %417 = vmatpush.msra.mxu0 0.0
    %418 = vmatpush.msra.mxu0 0.0
    %419 = vmatpush.msra.mxu0 0.0
    %420 = vmatpush.msra.mxu0 0.0
    %421 = vmatpush.msra.mxu0 0.0
    %422 = vmatpush.msra.mxu0 0.0
    %423 = vmatpush.msra.mxu0 0.0
    %424 = vmatpush.msra.mxu0 0.0
    %425 = vmatpush.msra.mxu0 0.0
    %426 = vmatpush.msra.mxu0 0.0
    %427 = vmatpush.msra.mxu0 0.0
    %428 = vmatpush.msra.mxu0 0.0
    %429 = vmatpush.msra.mxu0 %v288
    %430 = vmatpush.msra.mxu0 %v287
    %431 = vmatpush.msra.mxu0 %v286
    %432 = vmatpush.msra.mxu0 %v285
    %433 = vmatmul.f32.gmra.mxu0 %v415
    %v434 = vpop.f32.mrf.mxu0
    %v435 = vadd.f32 0.0, %v434
    %436 = vdwg.mxu0
    %v437 = vadd.f32 %v413, %v435
    %v438 = vmul.f32 %v437, 0.5
    %v439 = vtanh.pop %v438
    %v440 = vmul.f32 %v439, 0.5
    %v441 = vadd.f32 %v440, 0.5
    %s442 = scalar_lea.vmem [#allocation4], 8
    %v443 = vld [vmem:[%s442] sm:$0xff]
    %444 = vmatpush.msra.mxu0 0.0
    %445 = vmatpush.msra.mxu0 0.0
    %446 = vmatpush.msra.mxu0 0.0
    %447 = vmatpush.msra.mxu0 0.0
    %448 = vmatpush.msra.mxu0 0.0
    %449 = vmatpush.msra.mxu0 0.0
    %450 = vmatpush.msra.mxu0 0.0
    %451 = vmatpush.msra.mxu0 0.0
    %452 = vmatpush.msra.mxu0 0.0
    %453 = vmatpush.msra.mxu0 0.0
    %454 = vmatpush.msra.mxu0 0.0
    %455 = vmatpush.msra.mxu0 0.0
    %456 = vmatpush.msra.mxu0 %v292
    %457 = vmatpush.msra.mxu0 %v291
    %458 = vmatpush.msra.mxu0 %v290
    %459 = vmatpush.msra.mxu0 %v289
    %460 = vmatmul.f32.gmra.mxu0 %v415
    %v461 = vpop.f32.mrf.mxu0
    %v462 = vadd.f32 0.0, %v461
    %463 = vdwg.mxu0
    %v464 = vadd.f32 %v443, %v462
    %v465 = vmul.f32 %v464, 0.5
    %v466 = vtanh.pop %v465
    %v467 = vmul.f32 %v466, 0.5
    %v468 = vadd.f32 %v467, 0.5
    %s469 = scalar_lea.vmem [#allocation5], 8
    %v470 = vld [vmem:[%s469] sm:$0xff]
    %471 = vmatpush.msra.mxu0 0.0
    %472 = vmatpush.msra.mxu0 0.0
    %473 = vmatpush.msra.mxu0 0.0
    %474 = vmatpush.msra.mxu0 0.0
    %475 = vmatpush.msra.mxu0 0.0
    %476 = vmatpush.msra.mxu0 0.0
    %477 = vmatpush.msra.mxu0 0.0
    %478 = vmatpush.msra.mxu0 0.0
    %479 = vmatpush.msra.mxu0 0.0
    %480 = vmatpush.msra.mxu0 0.0
    %481 = vmatpush.msra.mxu0 0.0
    %482 = vmatpush.msra.mxu0 0.0
    %483 = vmatpush.msra.mxu0 %v296
    %484 = vmatpush.msra.mxu0 %v295
    %485 = vmatpush.msra.mxu0 %v294
    %486 = vmatpush.msra.mxu0 %v293
    %487 = vmatmul.f32.gmra.mxu0 %v415
    %v488 = vpop.f32.mrf.mxu0
    %v489 = vadd.f32 0.0, %v488
    %490 = vdwg.mxu0
    %v491 = vadd.f32 %v470, %v489
    %v492 = vtanh.pop %v491
    %s493 = scalar_lea.vmem [#allocation6], 8
    %v494 = vld [vmem:[%s493] sm:$0xff]
    %495 = vmatpush.msra.mxu0 0.0
    %496 = vmatpush.msra.mxu0 0.0
    %497 = vmatpush.msra.mxu0 0.0
    %498 = vmatpush.msra.mxu0 0.0
    %499 = vmatpush.msra.mxu0 0.0
    %500 = vmatpush.msra.mxu0 0.0
    %501 = vmatpush.msra.mxu0 0.0
    %502 = vmatpush.msra.mxu0 0.0
    %503 = vmatpush.msra.mxu0 0.0
    %504 = vmatpush.msra.mxu0 0.0
    %505 = vmatpush.msra.mxu0 0.0
    %506 = vmatpush.msra.mxu0 0.0
    %507 = vmatpush.msra.mxu0 %v300
    %508 = vmatpush.msra.mxu0 %v299
    %509 = vmatpush.msra.mxu0 %v298
    %510 = vmatpush.msra.mxu0 %v297
    %511 = vmatmul.f32.gmra.mxu0 %v415
    %v512 = vpop.f32.mrf.mxu0
    %v513 = vadd.f32 0.0, %v512
    %514 = vdwg.mxu0
    %v515 = vadd.f32 %v494, %v513
    %v516 = vmul.f32 %v515, 0.5
    %v517 = vtanh.pop %v516
    %v518 = vmul.f32 %v517, 0.5
    %v519 = vadd.f32 %v518, 0.5
    %v520 = vmul.f32 %v468, %v409
    %v521 = vmul.f32 %v441, %v492
    %v522 = vadd.f32 %v520, %v521
    %v523 = vtanh.pop %v522
    %v524 = vmul.f32 %v519, %v523
    %s525 = scalar_lea.vmem [#allocation3], 16
    %v526 = vld [vmem:[%s525] sm:$0xff]
    %v528 = vsel %vm105, %v524, 0
    %530 = vmatpush.msra.mxu0 0.0
    %531 = vmatpush.msra.mxu0 0.0
    %532 = vmatpush.msra.mxu0 0.0
    %533 = vmatpush.msra.mxu0 0.0
    %534 = vmatpush.msra.mxu0 0.0
    %535 = vmatpush.msra.mxu0 0.0
    %536 = vmatpush.msra.mxu0 0.0
    %537 = vmatpush.msra.mxu0 0.0
    %538 = vmatpush.msra.mxu0 0.0
    %539 = vmatpush.msra.mxu0 0.0
    %540 = vmatpush.msra.mxu0 0.0
    %541 = vmatpush.msra.mxu0 0.0
    %542 = vmatpush.msra.mxu0 %v288
    %543 = vmatpush.msra.mxu0 %v287
    %544 = vmatpush.msra.mxu0 %v286
    %545 = vmatpush.msra.mxu0 %v285
    %546 = vmatmul.f32.gmra.mxu0 %v528
    %v547 = vpop.f32.mrf.mxu0
    %v548 = vadd.f32 0.0, %v547
    %549 = vdwg.mxu0
    %v550 = vadd.f32 %v526, %v548
    %v551 = vmul.f32 %v550, 0.5
    %v552 = vtanh.pop %v551
    %v553 = vmul.f32 %v552, 0.5
    %v554 = vadd.f32 %v553, 0.5
    %s555 = scalar_lea.vmem [#allocation4], 16
    %v556 = vld [vmem:[%s555] sm:$0xff]
    %557 = vmatpush.msra.mxu0 0.0
    %558 = vmatpush.msra.mxu0 0.0
    %559 = vmatpush.msra.mxu0 0.0
    %560 = vmatpush.msra.mxu0 0.0
    %561 = vmatpush.msra.mxu0 0.0
    %562 = vmatpush.msra.mxu0 0.0
    %563 = vmatpush.msra.mxu0 0.0
    %564 = vmatpush.msra.mxu0 0.0
    %565 = vmatpush.msra.mxu0 0.0
    %566 = vmatpush.msra.mxu0 0.0
    %567 = vmatpush.msra.mxu0 0.0
    %568 = vmatpush.msra.mxu0 0.0
    %569 = vmatpush.msra.mxu0 %v292
    %570 = vmatpush.msra.mxu0 %v291
    %571 = vmatpush.msra.mxu0 %v290
    %572 = vmatpush.msra.mxu0 %v289
    %573 = vmatmul.f32.gmra.mxu0 %v528
    %v574 = vpop.f32.mrf.mxu0
    %v575 = vadd.f32 0.0, %v574
    %576 = vdwg.mxu0
    %v577 = vadd.f32 %v556, %v575
    %v578 = vmul.f32 %v577, 0.5
    %v579 = vtanh.pop %v578
    %v580 = vmul.f32 %v579, 0.5
    %v581 = vadd.f32 %v580, 0.5
    %s582 = scalar_lea.vmem [#allocation5], 16
    %v583 = vld [vmem:[%s582] sm:$0xff]
    %584 = vmatpush.msra.mxu0 0.0
    %585 = vmatpush.msra.mxu0 0.0
    %586 = vmatpush.msra.mxu0 0.0
    %587 = vmatpush.msra.mxu0 0.0
    %588 = vmatpush.msra.mxu0 0.0
    %589 = vmatpush.msra.mxu0 0.0
    %590 = vmatpush.msra.mxu0 0.0
    %591 = vmatpush.msra.mxu0 0.0
    %592 = vmatpush.msra.mxu0 0.0
    %593 = vmatpush.msra.mxu0 0.0
    %594 = vmatpush.msra.mxu0 0.0
    %595 = vmatpush.msra.mxu0 0.0
    %596 = vmatpush.msra.mxu0 %v296
    %597 = vmatpush.msra.mxu0 %v295
    %598 = vmatpush.msra.mxu0 %v294
    %599 = vmatpush.msra.mxu0 %v293
    %600 = vmatmul.f32.gmra.mxu0 %v528
    %v601 = vpop.f32.mrf.mxu0
    %v602 = vadd.f32 0.0, %v601
    %603 = vdwg.mxu0
    %v604 = vadd.f32 %v583, %v602
    %v605 = vtanh.pop %v604
    %s606 = scalar_lea.vmem [#allocation6], 16
    %v607 = vld [vmem:[%s606] sm:$0xff]
    %608 = vmatpush.msra.mxu0 0.0
    %609 = vmatpush.msra.mxu0 0.0
    %610 = vmatpush.msra.mxu0 0.0
    %611 = vmatpush.msra.mxu0 0.0
    %612 = vmatpush.msra.mxu0 0.0
    %613 = vmatpush.msra.mxu0 0.0
    %614 = vmatpush.msra.mxu0 0.0
    %615 = vmatpush.msra.mxu0 0.0
    %616 = vmatpush.msra.mxu0 0.0
    %617 = vmatpush.msra.mxu0 0.0
    %618 = vmatpush.msra.mxu0 0.0
    %619 = vmatpush.msra.mxu0 0.0
    %620 = vmatpush.msra.mxu0 %v300
    %621 = vmatpush.msra.mxu0 %v299
    %622 = vmatpush.msra.mxu0 %v298
    %623 = vmatpush.msra.mxu0 %v297
    %624 = vmatmul.f32.gmra.mxu0 %v528
    %v625 = vpop.f32.mrf.mxu0
    %v626 = vadd.f32 0.0, %v625
    %627 = vdwg.mxu0
    %v628 = vadd.f32 %v607, %v626
    %v629 = vmul.f32 %v628, 0.5
    %v630 = vtanh.pop %v629
    %v631 = vmul.f32 %v630, 0.5
    %v632 = vadd.f32 %v631, 0.5
    %v633 = vmul.f32 %v581, %v522
    %v634 = vmul.f32 %v554, %v605
    %v635 = vadd.f32 %v633, %v634
    %v636 = vtanh.pop %v635
    %v637 = vmul.f32 %v632, %v636
    %s638 = scalar_lea.vmem [#allocation3], 24
    %v639 = vld [vmem:[%s638] sm:$0xff]
    %v641 = vsel %vm105, %v637, 0
    %643 = vmatpush.msra.mxu0 0.0
    %644 = vmatpush.msra.mxu0 0.0
    %645 = vmatpush.msra.mxu0 0.0
    %646 = vmatpush.msra.mxu0 0.0
    %647 = vmatpush.msra.mxu0 0.0
    %648 = vmatpush.msra.mxu0 0.0
    %649 = vmatpush.msra.mxu0 0.0
    %650 = vmatpush.msra.mxu0 0.0
    %651 = vmatpush.msra.mxu0 0.0
    %652 = vmatpush.msra.mxu0 0.0
    %653 = vmatpush.msra.mxu0 0.0
    %654 = vmatpush.msra.mxu0 0.0
    %655 = vmatpush.msra.mxu0 %v288
    %656 = vmatpush.msra.mxu0 %v287
    %657 = vmatpush.msra.mxu0 %v286
    %658 = vmatpush.msra.mxu0 %v285
    %659 = vmatmul.f32.gmra.mxu0 %v641
    %v660 = vpop.f32.mrf.mxu0
    %v661 = vadd.f32 0.0, %v660
    %662 = vdwg.mxu0
    %v663 = vadd.f32 %v639, %v661
    %v664 = vmul.f32 %v663, 0.5
    %v665 = vtanh.pop %v664
    %v666 = vmul.f32 %v665, 0.5
    %v667 = vadd.f32 %v666, 0.5
    %s668 = scalar_lea.vmem [#allocation4], 24
    %v669 = vld [vmem:[%s668] sm:$0xff]
    %670 = vmatpush.msra.mxu0 0.0
    %671 = vmatpush.msra.mxu0 0.0
    %672 = vmatpush.msra.mxu0 0.0
    %673 = vmatpush.msra.mxu0 0.0
    %674 = vmatpush.msra.mxu0 0.0
    %675 = vmatpush.msra.mxu0 0.0
    %676 = vmatpush.msra.mxu0 0.0
    %677 = vmatpush.msra.mxu0 0.0
    %678 = vmatpush.msra.mxu0 0.0
    %679 = vmatpush.msra.mxu0 0.0
    %680 = vmatpush.msra.mxu0 0.0
    %681 = vmatpush.msra.mxu0 0.0
    %682 = vmatpush.msra.mxu0 %v292
    %683 = vmatpush.msra.mxu0 %v291
    %684 = vmatpush.msra.mxu0 %v290
    %685 = vmatpush.msra.mxu0 %v289
    %686 = vmatmul.f32.gmra.mxu0 %v641
    %v687 = vpop.f32.mrf.mxu0
    %v688 = vadd.f32 0.0, %v687
    %689 = vdwg.mxu0
    %v690 = vadd.f32 %v669, %v688
    %v691 = vmul.f32 %v690, 0.5
    %v692 = vtanh.pop %v691
    %v693 = vmul.f32 %v692, 0.5
    %v694 = vadd.f32 %v693, 0.5
    %s695 = scalar_lea.vmem [#allocation5], 24
    %v696 = vld [vmem:[%s695] sm:$0xff]
    %697 = vmatpush.msra.mxu0 0.0
    %698 = vmatpush.msra.mxu0 0.0
    %699 = vmatpush.msra.mxu0 0.0
    %700 = vmatpush.msra.mxu0 0.0
    %701 = vmatpush.msra.mxu0 0.0
    %702 = vmatpush.msra.mxu0 0.0
    %703 = vmatpush.msra.mxu0 0.0
    %704 = vmatpush.msra.mxu0 0.0
    %705 = vmatpush.msra.mxu0 0.0
    %706 = vmatpush.msra.mxu0 0.0
    %707 = vmatpush.msra.mxu0 0.0
    %708 = vmatpush.msra.mxu0 0.0
    %709 = vmatpush.msra.mxu0 %v296
    %710 = vmatpush.msra.mxu0 %v295
    %711 = vmatpush.msra.mxu0 %v294
    %712 = vmatpush.msra.mxu0 %v293
    %713 = vmatmul.f32.gmra.mxu0 %v641
    %v714 = vpop.f32.mrf.mxu0
    %v715 = vadd.f32 0.0, %v714
    %716 = vdwg.mxu0
    %v717 = vadd.f32 %v696, %v715
    %v718 = vtanh.pop %v717
    %s719 = scalar_lea.vmem [#allocation6], 24
    %v720 = vld [vmem:[%s719] sm:$0xff]
    %721 = vmatpush.msra.mxu0 0.0
    %722 = vmatpush.msra.mxu0 0.0
    %723 = vmatpush.msra.mxu0 0.0
    %724 = vmatpush.msra.mxu0 0.0
    %725 = vmatpush.msra.mxu0 0.0
    %726 = vmatpush.msra.mxu0 0.0
    %727 = vmatpush.msra.mxu0 0.0
    %728 = vmatpush.msra.mxu0 0.0
    %729 = vmatpush.msra.mxu0 0.0
    %730 = vmatpush.msra.mxu0 0.0
    %731 = vmatpush.msra.mxu0 0.0
    %732 = vmatpush.msra.mxu0 0.0
    %733 = vmatpush.msra.mxu0 %v300
    %734 = vmatpush.msra.mxu0 %v299
    %735 = vmatpush.msra.mxu0 %v298
    %736 = vmatpush.msra.mxu0 %v297
    %737 = vmatmul.f32.gmra.mxu0 %v641
    %v738 = vpop.f32.mrf.mxu0
    %v739 = vadd.f32 0.0, %v738
    %740 = vdwg.mxu0
    %v741 = vadd.f32 %v720, %v739
    %v742 = vmul.f32 %v741, 0.5
    %v743 = vtanh.pop %v742
    %v744 = vmul.f32 %v743, 0.5
    %v745 = vadd.f32 %v744, 0.5
    %v746 = vmul.f32 %v694, %v635
    %v747 = vmul.f32 %v667, %v718
    %v748 = vadd.f32 %v746, %v747
    %v749 = vtanh.pop %v748
    %v750 = vmul.f32 %v745, %v749
    %s751 = scalar_lea.vmem [#allocation3], 32
    %v752 = vld [vmem:[%s751] sm:$0xff]
    %v754 = vsel %vm105, %v750, 0
    %756 = vmatpush.msra.mxu0 0.0
    %757 = vmatpush.msra.mxu0 0.0
    %758 = vmatpush.msra.mxu0 0.0
    %759 = vmatpush.msra.mxu0 0.0
    %760 = vmatpush.msra.mxu0 0.0
    %761 = vmatpush.msra.mxu0 0.0
    %762 = vmatpush.msra.mxu0 0.0
    %763 = vmatpush.msra.mxu0 0.0
    %764 = vmatpush.msra.mxu0 0.0
    %765 = vmatpush.msra.mxu0 0.0
    %766 = vmatpush.msra.mxu0 0.0
    %767 = vmatpush.msra.mxu0 0.0
    %768 = vmatpush.msra.mxu0 %v288
    %769 = vmatpush.msra.mxu0 %v287
    %770 = vmatpush.msra.mxu0 %v286
    %771 = vmatpush.msra.mxu0 %v285
    %772 = vmatmul.f32.gmra.mxu0 %v754
    %v773 = vpop.f32.mrf.mxu0
    %v774 = vadd.f32 0.0, %v773
    %775 = vdwg.mxu0
    %v776 = vadd.f32 %v752, %v774
    %v777 = vmul.f32 %v776, 0.5
    %v778 = vtanh.pop %v777
    %v779 = vmul.f32 %v778, 0.5
    %v780 = vadd.f32 %v779, 0.5
    %s781 = scalar_lea.vmem [#allocation4], 32
    %v782 = vld [vmem:[%s781] sm:$0xff]
    %783 = vmatpush.msra.mxu0 0.0
    %784 = vmatpush.msra.mxu0 0.0
    %785 = vmatpush.msra.mxu0 0.0
    %786 = vmatpush.msra.mxu0 0.0
    %787 = vmatpush.msra.mxu0 0.0
    %788 = vmatpush.msra.mxu0 0.0
    %789 = vmatpush.msra.mxu0 0.0
    %790 = vmatpush.msra.mxu0 0.0
    %791 = vmatpush.msra.mxu0 0.0
    %792 = vmatpush.msra.mxu0 0.0
    %793 = vmatpush.msra.mxu0 0.0
    %794 = vmatpush.msra.mxu0 0.0
    %795 = vmatpush.msra.mxu0 %v292
    %796 = vmatpush.msra.mxu0 %v291
    %797 = vmatpush.msra.mxu0 %v290
    %798 = vmatpush.msra.mxu0 %v289
    %799 = vmatmul.f32.gmra.mxu0 %v754
    %v800 = vpop.f32.mrf.mxu0
    %v801 = vadd.f32 0.0, %v800
    %802 = vdwg.mxu0
    %v803 = vadd.f32 %v782, %v801
    %v804 = vmul.f32 %v803, 0.5
    %v805 = vtanh.pop %v804
    %v806 = vmul.f32 %v805, 0.5
    %v807 = vadd.f32 %v806, 0.5
    %s808 = scalar_lea.vmem [#allocation5], 32
    %v809 = vld [vmem:[%s808] sm:$0xff]
    %810 = vmatpush.msra.mxu0 0.0
    %811 = vmatpush.msra.mxu0 0.0
    %812 = vmatpush.msra.mxu0 0.0
    %813 = vmatpush.msra.mxu0 0.0
    %814 = vmatpush.msra.mxu0 0.0
    %815 = vmatpush.msra.mxu0 0.0
    %816 = vmatpush.msra.mxu0 0.0
    %817 = vmatpush.msra.mxu0 0.0
    %818 = vmatpush.msra.mxu0 0.0
    %819 = vmatpush.msra.mxu0 0.0
    %820 = vmatpush.msra.mxu0 0.0
    %821 = vmatpush.msra.mxu0 0.0
    %822 = vmatpush.msra.mxu0 %v296
    %823 = vmatpush.msra.mxu0 %v295
    %824 = vmatpush.msra.mxu0 %v294
    %825 = vmatpush.msra.mxu0 %v293
    %826 = vmatmul.f32.gmra.mxu0 %v754
    %v827 = vpop.f32.mrf.mxu0
    %v828 = vadd.f32 0.0, %v827
    %829 = vdwg.mxu0
    %v830 = vadd.f32 %v809, %v828
    %v831 = vtanh.pop %v830
    %s832 = scalar_lea.vmem [#allocation6], 32
    %v833 = vld [vmem:[%s832] sm:$0xff]
    %834 = vmatpush.msra.mxu0 0.0
    %835 = vmatpush.msra.mxu0 0.0
    %836 = vmatpush.msra.mxu0 0.0
    %837 = vmatpush.msra.mxu0 0.0
    %838 = vmatpush.msra.mxu0 0.0
    %839 = vmatpush.msra.mxu0 0.0
    %840 = vmatpush.msra.mxu0 0.0
    %841 = vmatpush.msra.mxu0 0.0
    %842 = vmatpush.msra.mxu0 0.0
    %843 = vmatpush.msra.mxu0 0.0
    %844 = vmatpush.msra.mxu0 0.0
    %845 = vmatpush.msra.mxu0 0.0
    %846 = vmatpush.msra.mxu0 %v300
    %847 = vmatpush.msra.mxu0 %v299
    %848 = vmatpush.msra.mxu0 %v298
    %849 = vmatpush.msra.mxu0 %v297
    %850 = vmatmul.f32.gmra.mxu0 %v754
    %v851 = vpop.f32.mrf.mxu0
    %v852 = vadd.f32 0.0, %v851
    %853 = vdwg.mxu0
    %v854 = vadd.f32 %v833, %v852
    %v855 = vmul.f32 %v854, 0.5
    %v856 = vtanh.pop %v855
    %v857 = vmul.f32 %v856, 0.5
    %v858 = vadd.f32 %v857, 0.5
    %v859 = vmul.f32 %v807, %v748
    %v860 = vmul.f32 %v780, %v831
    %v861 = vadd.f32 %v859, %v860
    %v862 = vtanh.pop %v861
    %v863 = vmul.f32 %v858, %v862
    %s864 = scalar_lea.vmem [#allocation3], 40
    %v865 = vld [vmem:[%s864] sm:$0xff]
    %v867 = vsel %vm105, %v863, 0
    %869 = vmatpush.msra.mxu0 0.0
    %870 = vmatpush.msra.mxu0 0.0
    %871 = vmatpush.msra.mxu0 0.0
    %872 = vmatpush.msra.mxu0 0.0
    %873 = vmatpush.msra.mxu0 0.0
    %874 = vmatpush.msra.mxu0 0.0
    %875 = vmatpush.msra.mxu0 0.0
    %876 = vmatpush.msra.mxu0 0.0
    %877 = vmatpush.msra.mxu0 0.0
    %878 = vmatpush.msra.mxu0 0.0
    %879 = vmatpush.msra.mxu0 0.0
    %880 = vmatpush.msra.mxu0 0.0
    %881 = vmatpush.msra.mxu0 %v288
    %882 = vmatpush.msra.mxu0 %v287
    %883 = vmatpush.msra.mxu0 %v286
    %884 = vmatpush.msra.mxu0 %v285
    %885 = vmatmul.f32.gmra.mxu0 %v867
    %v886 = vpop.f32.mrf.mxu0
    %v887 = vadd.f32 0.0, %v886
    %888 = vdwg.mxu0
    %v889 = vadd.f32 %v865, %v887
    %v890 = vmul.f32 %v889, 0.5
    %v891 = vtanh.pop %v890
    %v892 = vmul.f32 %v891, 0.5
    %v893 = vadd.f32 %v892, 0.5
    %s894 = scalar_lea.vmem [#allocation4], 40
    %v895 = vld [vmem:[%s894] sm:$0xff]
    %896 = vmatpush.msra.mxu0 0.0
    %897 = vmatpush.msra.mxu0 0.0
    %898 = vmatpush.msra.mxu0 0.0
    %899 = vmatpush.msra.mxu0 0.0
    %900 = vmatpush.msra.mxu0 0.0
    %901 = vmatpush.msra.mxu0 0.0
    %902 = vmatpush.msra.mxu0 0.0
    %903 = vmatpush.msra.mxu0 0.0
    %904 = vmatpush.msra.mxu0 0.0
    %905 = vmatpush.msra.mxu0 0.0
    %906 = vmatpush.msra.mxu0 0.0
    %907 = vmatpush.msra.mxu0 0.0
    %908 = vmatpush.msra.mxu0 %v292
    %909 = vmatpush.msra.mxu0 %v291
    %910 = vmatpush.msra.mxu0 %v290
    %911 = vmatpush.msra.mxu0 %v289
    %912 = vmatmul.f32.gmra.mxu0 %v867
    %v913 = vpop.f32.mrf.mxu0
    %v914 = vadd.f32 0.0, %v913
    %915 = vdwg.mxu0
    %v916 = vadd.f32 %v895, %v914
    %v917 = vmul.f32 %v916, 0.5
    %v918 = vtanh.pop %v917
    %v919 = vmul.f32 %v918, 0.5
    %v920 = vadd.f32 %v919, 0.5
    %s921 = scalar_lea.vmem [#allocation5], 40
    %v922 = vld [vmem:[%s921] sm:$0xff]
    %923 = vmatpush.msra.mxu0 0.0
    %924 = vmatpush.msra.mxu0 0.0
    %925 = vmatpush.msra.mxu0 0.0
    %926 = vmatpush.msra.mxu0 0.0
    %927 = vmatpush.msra.mxu0 0.0
    %928 = vmatpush.msra.mxu0 0.0
    %929 = vmatpush.msra.mxu0 0.0
    %930 = vmatpush.msra.mxu0 0.0
    %931 = vmatpush.msra.mxu0 0.0
    %932 = vmatpush.msra.mxu0 0.0
    %933 = vmatpush.msra.mxu0 0.0
    %934 = vmatpush.msra.mxu0 0.0
    %935 = vmatpush.msra.mxu0 %v296
    %936 = vmatpush.msra.mxu0 %v295
    %937 = vmatpush.msra.mxu0 %v294
    %938 = vmatpush.msra.mxu0 %v293
    %939 = vmatmul.f32.gmra.mxu0 %v867
    %v940 = vpop.f32.mrf.mxu0
    %v941 = vadd.f32 0.0, %v940
    %942 = vdwg.mxu0
    %v943 = vadd.f32 %v922, %v941
    %v944 = vtanh.pop %v943
    %s945 = scalar_lea.vmem [#allocation6], 40
    %v946 = vld [vmem:[%s945] sm:$0xff]
    %947 = vmatpush.msra.mxu0 0.0
    %948 = vmatpush.msra.mxu0 0.0
    %949 = vmatpush.msra.mxu0 0.0
    %950 = vmatpush.msra.mxu0 0.0
    %951 = vmatpush.msra.mxu0 0.0
    %952 = vmatpush.msra.mxu0 0.0
    %953 = vmatpush.msra.mxu0 0.0
    %954 = vmatpush.msra.mxu0 0.0
    %955 = vmatpush.msra.mxu0 0.0
    %956 = vmatpush.msra.mxu0 0.0
    %957 = vmatpush.msra.mxu0 0.0
    %958 = vmatpush.msra.mxu0 0.0
    %959 = vmatpush.msra.mxu0 %v300
    %960 = vmatpush.msra.mxu0 %v299
    %961 = vmatpush.msra.mxu0 %v298
    %962 = vmatpush.msra.mxu0 %v297
    %963 = vmatmul.f32.gmra.mxu0 %v867
    %v964 = vpop.f32.mrf.mxu0
    %v965 = vadd.f32 0.0, %v964
    %966 = vdwg.mxu0
    %v967 = vadd.f32 %v946, %v965
    %v968 = vmul.f32 %v967, 0.5
    %v969 = vtanh.pop %v968
    %v970 = vmul.f32 %v969, 0.5
    %v971 = vadd.f32 %v970, 0.5
    %v972 = vmul.f32 %v920, %v861
    %v973 = vmul.f32 %v893, %v944
    %v974 = vadd.f32 %v972, %v973
    %v975 = vtanh.pop %v974
    %v976 = vmul.f32 %v971, %v975
    %s977 = scalar_lea.vmem [#allocation3], 48
    %v978 = vld [vmem:[%s977] sm:$0xff]
    %v980 = vsel %vm105, %v976, 0
    %982 = vmatpush.msra.mxu0 0.0
    %983 = vmatpush.msra.mxu0 0.0
    %984 = vmatpush.msra.mxu0 0.0
    %985 = vmatpush.msra.mxu0 0.0
    %986 = vmatpush.msra.mxu0 0.0
    %987 = vmatpush.msra.mxu0 0.0
    %988 = vmatpush.msra.mxu0 0.0
    %989 = vmatpush.msra.mxu0 0.0
    %990 = vmatpush.msra.mxu0 0.0
    %991 = vmatpush.msra.mxu0 0.0
    %992 = vmatpush.msra.mxu0 0.0
    %993 = vmatpush.msra.mxu0 0.0
    %994 = vmatpush.msra.mxu0 %v288
    %995 = vmatpush.msra.mxu0 %v287
    %996 = vmatpush.msra.mxu0 %v286
    %997 = vmatpush.msra.mxu0 %v285
    %998 = vmatmul.f32.gmra.mxu0 %v980
    %v999 = vpop.f32.mrf.mxu0
    %v1000 = vadd.f32 0.0, %v999
    %1001 = vdwg.mxu0
    %v1002 = vadd.f32 %v978, %v1000
    %v1003 = vmul.f32 %v1002, 0.5
    %v1004 = vtanh.pop %v1003
    %v1005 = vmul.f32 %v1004, 0.5
    %v1006 = vadd.f32 %v1005, 0.5
    %s1007 = scalar_lea.vmem [#allocation4], 48
    %v1008 = vld [vmem:[%s1007] sm:$0xff]
    %1009 = vmatpush.msra.mxu0 0.0
    %1010 = vmatpush.msra.mxu0 0.0
    %1011 = vmatpush.msra.mxu0 0.0
    %1012 = vmatpush.msra.mxu0 0.0
    %1013 = vmatpush.msra.mxu0 0.0
    %1014 = vmatpush.msra.mxu0 0.0
    %1015 = vmatpush.msra.mxu0 0.0
    %1016 = vmatpush.msra.mxu0 0.0
    %1017 = vmatpush.msra.mxu0 0.0
    %1018 = vmatpush.msra.mxu0 0.0
    %1019 = vmatpush.msra.mxu0 0.0
    %1020 = vmatpush.msra.mxu0 0.0
    %1021 = vmatpush.msra.mxu0 %v292
    %1022 = vmatpush.msra.mxu0 %v291
    %1023 = vmatpush.msra.mxu0 %v290
    %1024 = vmatpush.msra.mxu0 %v289
    %1025 = vmatmul.f32.gmra.mxu0 %v980
    %v1026 = vpop.f32.mrf.mxu0
    %v1027 = vadd.f32 0.0, %v1026
    %1028 = vdwg.mxu0
    %v1029 = vadd.f32 %v1008, %v1027
    %v1030 = vmul.f32 %v1029, 0.5
    %v1031 = vtanh.pop %v1030
    %v1032 = vmul.f32 %v1031, 0.5
    %v1033 = vadd.f32 %v1032, 0.5
    %s1034 = scalar_lea.vmem [#allocation5], 48
    %v1035 = vld [vmem:[%s1034] sm:$0xff]
    %1036 = vmatpush.msra.mxu0 0.0
    %1037 = vmatpush.msra.mxu0 0.0
    %1038 = vmatpush.msra.mxu0 0.0
    %1039 = vmatpush.msra.mxu0 0.0
    %1040 = vmatpush.msra.mxu0 0.0
    %1041 = vmatpush.msra.mxu0 0.0
    %1042 = vmatpush.msra.mxu0 0.0
    %1043 = vmatpush.msra.mxu0 0.0
    %1044 = vmatpush.msra.mxu0 0.0
    %1045 = vmatpush.msra.mxu0 0.0
    %1046 = vmatpush.msra.mxu0 0.0
    %1047 = vmatpush.msra.mxu0 0.0
    %1048 = vmatpush.msra.mxu0 %v296
    %1049 = vmatpush.msra.mxu0 %v295
    %1050 = vmatpush.msra.mxu0 %v294
    %1051 = vmatpush.msra.mxu0 %v293
    %1052 = vmatmul.f32.gmra.mxu0 %v980
    %v1053 = vpop.f32.mrf.mxu0
    %v1054 = vadd.f32 0.0, %v1053
    %1055 = vdwg.mxu0
    %v1056 = vadd.f32 %v1035, %v1054
    %v1057 = vtanh.pop %v1056
    %s1058 = scalar_lea.vmem [#allocation6], 48
    %v1059 = vld [vmem:[%s1058] sm:$0xff]
    %1060 = vmatpush.msra.mxu0 0.0
    %1061 = vmatpush.msra.mxu0 0.0
    %1062 = vmatpush.msra.mxu0 0.0
    %1063 = vmatpush.msra.mxu0 0.0
    %1064 = vmatpush.msra.mxu0 0.0
    %1065 = vmatpush.msra.mxu0 0.0
    %1066 = vmatpush.msra.mxu0 0.0
    %1067 = vmatpush.msra.mxu0 0.0
    %1068 = vmatpush.msra.mxu0 0.0
    %1069 = vmatpush.msra.mxu0 0.0
    %1070 = vmatpush.msra.mxu0 0.0
    %1071 = vmatpush.msra.mxu0 0.0
    %1072 = vmatpush.msra.mxu0 %v300
    %1073 = vmatpush.msra.mxu0 %v299
    %1074 = vmatpush.msra.mxu0 %v298
    %1075 = vmatpush.msra.mxu0 %v297
    %1076 = vmatmul.f32.gmra.mxu0 %v980
    %v1077 = vpop.f32.mrf.mxu0
    %v1078 = vadd.f32 0.0, %v1077
    %1079 = vdwg.mxu0
    %v1080 = vadd.f32 %v1059, %v1078
    %v1081 = vmul.f32 %v1080, 0.5
    %v1082 = vtanh.pop %v1081
    %v1083 = vmul.f32 %v1082, 0.5
    %v1084 = vadd.f32 %v1083, 0.5
    %v1085 = vmul.f32 %v1033, %v974
    %v1086 = vmul.f32 %v1006, %v1057
    %v1087 = vadd.f32 %v1085, %v1086
    %v1088 = vtanh.pop %v1087
    %v1089 = vmul.f32 %v1084, %v1088
    %s1090 = scalar_lea.vmem [#allocation3], 56
    %v1091 = vld [vmem:[%s1090] sm:$0xff]
    %v1093 = vsel %vm105, %v1089, 0
    %1095 = vmatpush.msra.mxu0 0.0
    %1096 = vmatpush.msra.mxu0 0.0
    %1097 = vmatpush.msra.mxu0 0.0
    %1098 = vmatpush.msra.mxu0 0.0
    %1099 = vmatpush.msra.mxu0 0.0
    %1100 = vmatpush.msra.mxu0 0.0
    %1101 = vmatpush.msra.mxu0 0.0
    %1102 = vmatpush.msra.mxu0 0.0
    %1103 = vmatpush.msra.mxu0 0.0
    %1104 = vmatpush.msra.mxu0 0.0
    %1105 = vmatpush.msra.mxu0 0.0
    %1106 = vmatpush.msra.mxu0 0.0
    %1107 = vmatpush.msra.mxu0 %v288
    %1108 = vmatpush.msra.mxu0 %v287
    %1109 = vmatpush.msra.mxu0 %v286
    %1110 = vmatpush.msra.mxu0 %v285
    %1111 = vmatmul.f32.gmra.mxu0 %v1093
    %v1112 = vpop.f32.mrf.mxu0
    %v1113 = vadd.f32 0.0, %v1112
    %1114 = vdwg.mxu0
    %v1115 = vadd.f32 %v1091, %v1113
    %v1116 = vmul.f32 %v1115, 0.5
    %v1117 = vtanh.pop %v1116
    %v1118 = vmul.f32 %v1117, 0.5
    %v1119 = vadd.f32 %v1118, 0.5
    %s1120 = scalar_lea.vmem [#allocation4], 56
    %v1121 = vld [vmem:[%s1120] sm:$0xff]
    %1122 = vmatpush.msra.mxu0 0.0
    %1123 = vmatpush.msra.mxu0 0.0
    %1124 = vmatpush.msra.mxu0 0.0
    %1125 = vmatpush.msra.mxu0 0.0
    %1126 = vmatpush.msra.mxu0 0.0
    %1127 = vmatpush.msra.mxu0 0.0
    %1128 = vmatpush.msra.mxu0 0.0
    %1129 = vmatpush.msra.mxu0 0.0
    %1130 = vmatpush.msra.mxu0 0.0
    %1131 = vmatpush.msra.mxu0 0.0
    %1132 = vmatpush.msra.mxu0 0.0
    %1133 = vmatpush.msra.mxu0 0.0
    %1134 = vmatpush.msra.mxu0 %v292
    %1135 = vmatpush.msra.mxu0 %v291
    %1136 = vmatpush.msra.mxu0 %v290
    %1137 = vmatpush.msra.mxu0 %v289
    %1138 = vmatmul.f32.gmra.mxu0 %v1093
    %v1139 = vpop.f32.mrf.mxu0
    %v1140 = vadd.f32 0.0, %v1139
    %1141 = vdwg.mxu0
    %v1142 = vadd.f32 %v1121, %v1140
    %v1143 = vmul.f32 %v1142, 0.5
    %v1144 = vtanh.pop %v1143
    %v1145 = vmul.f32 %v1144, 0.5
    %v1146 = vadd.f32 %v1145, 0.5
    %s1147 = scalar_lea.vmem [#allocation5], 56
    %v1148 = vld [vmem:[%s1147] sm:$0xff]
    %1149 = vmatpush.msra.mxu0 0.0
    %1150 = vmatpush.msra.mxu0 0.0
    %1151 = vmatpush.msra.mxu0 0.0
    %1152 = vmatpush.msra.mxu0 0.0
    %1153 = vmatpush.msra.mxu0 0.0
    %1154 = vmatpush.msra.mxu0 0.0
    %1155 = vmatpush.msra.mxu0 0.0
    %1156 = vmatpush.msra.mxu0 0.0
    %1157 = vmatpush.msra.mxu0 0.0
    %1158 = vmatpush.msra.mxu0 0.0
    %1159 = vmatpush.msra.mxu0 0.0
    %1160 = vmatpush.msra.mxu0 0.0
    %1161 = vmatpush.msra.mxu0 %v296
    %1162 = vmatpush.msra.mxu0 %v295
    %1163 = vmatpush.msra.mxu0 %v294
    %1164 = vmatpush.msra.mxu0 %v293
    %1165 = vmatmul.f32.gmra.mxu0 %v1093
    %v1166 = vpop.f32.mrf.mxu0
    %v1167 = vadd.f32 0.0, %v1166
    %1168 = vdwg.mxu0
    %v1169 = vadd.f32 %v1148, %v1167
    %v1170 = vtanh.pop %v1169
    %s1171 = scalar_lea.vmem [#allocation6], 56
    %v1172 = vld [vmem:[%s1171] sm:$0xff]
    %1173 = vmatpush.msra.mxu0 0.0
    %1174 = vmatpush.msra.mxu0 0.0
    %1175 = vmatpush.msra.mxu0 0.0
    %1176 = vmatpush.msra.mxu0 0.0
    %1177 = vmatpush.msra.mxu0 0.0
    %1178 = vmatpush.msra.mxu0 0.0
    %1179 = vmatpush.msra.mxu0 0.0
    %1180 = vmatpush.msra.mxu0 0.0
    %1181 = vmatpush.msra.mxu0 0.0
    %1182 = vmatpush.msra.mxu0 0.0
    %1183 = vmatpush.msra.mxu0 0.0
    %1184 = vmatpush.msra.mxu0 0.0
    %1185 = vmatpush.msra.mxu0 %v300
    %1186 = vmatpush.msra.mxu0 %v299
    %1187 = vmatpush.msra.mxu0 %v298
    %1188 = vmatpush.msra.mxu0 %v297
    %1189 = vmatmul.f32.gmra.mxu0 %v1093
    %v1190 = vpop.f32.mrf.mxu0
    %v1191 = vadd.f32 0.0, %v1190
    %1192 = vdwg.mxu0
    %v1193 = vadd.f32 %v1172, %v1191
    %v1194 = vmul.f32 %v1193, 0.5
    %v1195 = vtanh.pop %v1194
    %v1196 = vmul.f32 %v1195, 0.5
    %v1197 = vadd.f32 %v1196, 0.5
    %v1198 = vmul.f32 %v1146, %v1087
    %v1199 = vmul.f32 %v1119, %v1170
    %v1200 = vadd.f32 %v1198, %v1199
    %v1201 = vtanh.pop %v1200
    %v1202 = vmul.f32 %v1197, %v1201
    %1203 = vst.msk [vmem:[#allocation7] sm:$0xff] %vm105, %v1202
    %1204 = vst.msk [vmem:[#allocation2] sm:$0xff] %vm105, %v1200
    // Predicated region
    $region22: #{rnn_lstm_pallas.1} parent=1 // pred_check
      _
    $region23: #{rnn_lstm_pallas.1} parent=1 // pred_check_branch
      %1206 = sbr.rel (0) target = $region25
    $region24: #{rnn_lstm_pallas.1} parent=1 // pred_region
      %1208 = vsyncadd [#allocation8], 0
      %s1210 = sshll.u32 [#allocation7], 4
      %s1211 = int_to_ptr.vmem [resolvable:$true] %s1210
      %s1212 = sshll.u32 %s4, 4
      %s1213 = int_to_ptr.hbm [resolvable:$true] %s1212
      %1215 = dma.vmem_to_hbm [thread:$0]  %s1211, 128, %s1213, [#allocation8]
    $region25: #{rnn_lstm_pallas.1} parent=1 // pred_fallthru
      _
    // Predicated region
    $region26: #{rnn_lstm_pallas.1} parent=1 // pred_check
      _
    $region27: #{rnn_lstm_pallas.1} parent=1 // pred_check_branch
      %1217 = sbr.rel (0) target = $region29
    $region28: #{rnn_lstm_pallas.1} parent=1 // pred_region
      %1219 = dma.done [#allocation8], 128
    $region29: #{rnn_lstm_pallas.1} parent=1 // pred_fallthru
      _
    %1220 = vsyncpa [#allocation8], 1

</llo_original>
